<compile_context>
chip_gen: v7x
topology: tpu7x:2x2x1
jax: 0.10.0
libtpu: 0.0.40
codegen_flags: <defaults>
</compile_context>

<pallas_src>
import functools

import jax
import jax.numpy as jnp
from jax import lax
from jax.experimental import pallas as pl
from jax.experimental.pallas import tpu as pltpu


def _dtype_bytes(dt):
    return jnp.dtype(dt).itemsize


def _vmem_defaults():
    """Per-generation VMEM budget / scoped limit (v7x: 64 MiB, v5e/v6e: 128 MiB)."""
    cap = None
    try:
        cap = getattr(pltpu.get_tpu_info(), "vmem_capacity_bytes", None)
    except Exception:
        cap = None
    if not cap or cap <= 0:
        cap = 64 * 2 ** 20                      # conservative: assume v7x
    limit = min(int(cap * 3 // 4), 100 * 2 ** 20)
    budget = min(int(cap * 55 // 100), 80 * 2 ** 20)
    return budget, limit


def _choose_tile_hw(hw, bytes_per_px, *, fixed_bytes, vmem_budget_bytes,
                    max_tile, force_split=False):
    """Biggest 128-aligned pixel tile that fits the VMEM budget."""
    if hw <= 128:
        return hw
    budget = max(vmem_budget_bytes - fixed_bytes, 2 * 2 ** 20)
    tile = min(max_tile, hw, budget // max(bytes_per_px, 1))
    tile = max((tile // 128) * 128, 128)
    if force_split and tile >= hw:
        # guarantee >= 2 pixel tiles so a 2-TensorCore chip (v7x) splits work
        half = -(-hw // 2)
        tile = max(128, -(-half // 128) * 128)
    return tile


# ----------------------------------------------------------------------------
# Kernel 1: BN batch-statistic accumulation (so `h = conv1(x)` never hits HBM).
# Accumulates  x @ x^T  (Cs,Cs) and  sum_pixels(x)  (Cs,1) per batch element
# across the pixel-tile axis directly in the output block; the h-channel
# mean / variance are recovered analytically from these in JAX.
# ----------------------------------------------------------------------------
def bn_stats_kernel(x_ref, xtx_ref, xsum_ref, *, tile_hw, hw_valid, need_mask,
                    mxu_dtype):
    j = pl.program_id(1)
    x = x_ref[0]                                             # (Cs, T) native
    if need_mask:
        lane = lax.broadcasted_iota(jnp.int32, x.shape, 1)
        x = jnp.where(lane < (hw_valid - j * tile_hw), x, 0)
    xm = x.astype(mxu_dtype)
    xtx = lax.dot_general(xm, xm, (((1,), (1,)), ((), ())),
                          preferred_element_type=jnp.float32)   # (Cs, Cs)
    xsum = jnp.sum(x.astype(jnp.float32), axis=1, keepdims=True)  # (Cs, 1)

    @pl.when(j == 0)
    def _():
        xtx_ref[...] = jnp.zeros_like(xtx_ref)
        xsum_ref[...] = jnp.zeros_like(xsum_ref)

    xtx_ref[...] += xtx.reshape(xtx_ref.shape)
    xsum_ref[...] += xsum.reshape(xsum_ref.shape)


def bn_partial_stats(xs, tile_hw, hw_valid, *, mxu_dtype, compiler_kwargs):
    B, Cs, HWp = xs.shape
    nT = pl.cdiv(HWp, tile_hw)
    need_mask = (HWp % tile_hw) != 0
    kern = functools.partial(bn_stats_kernel, tile_hw=tile_hw,
                             hw_valid=hw_valid, need_mask=need_mask,
                             mxu_dtype=mxu_dtype)
    return pl.pallas_call(
        kern,
        out_shape=(jax.ShapeDtypeStruct((B, Cs, Cs), jnp.float32),
                   jax.ShapeDtypeStruct((B, Cs, 1), jnp.float32)),
        grid=(B, nT),
        in_specs=[pl.BlockSpec((1, Cs, tile_hw), lambda b, j: (b, 0, j))],
        out_specs=(pl.BlockSpec((1, Cs, Cs), lambda b, j: (b, 0, 0)),
                   pl.BlockSpec((1, Cs, 1), lambda b, j: (b, 0, 0))),
        compiler_params=pltpu.CompilerParams(
            dimension_semantics=("parallel", "arbitrary"), **compiler_kwargs),
    )(xs)


# ----------------------------------------------------------------------------
# Kernel 2: fused projection head (BN folded into conv1) + ReLU + conv2 +
# L2 normalize (folded into the logit scale) + contrast logits + log-softmax +
# KL, reduced to per-pixel partial sums (lane-dense output).
# ----------------------------------------------------------------------------
def p2p_loss_kernel(x_ref, t_ref, w1f_ref, shift_ref, w2_ref, q_ref, out_ref,
                    *, inv_temp, tile_hw, hw_valid, need_mask, mxu_dtype,
                    const_max):
    # projection head on the MXU in mxu_dtype with f32 accumulation
    x = x_ref[0].astype(mxu_dtype)                                   # (Cs, T)
    h = jnp.dot(w1f_ref[...], x, preferred_element_type=jnp.float32)  # (Ct, T)
    h = jnp.maximum(h + shift_ref[...], 0.0)
    s = jnp.dot(w2_ref[...], h.astype(mxu_dtype),
                preferred_element_type=jnp.float32)                  # (Ct, T)

    # per-pixel L2 norms (F.normalize dim=1, eps=1e-12); 1/norm is folded into
    # the post-matmul logit scale so the (Ct,T) tensors are never rescaled.
    inv_ns = lax.rsqrt(jnp.maximum(jnp.sum(s * s, axis=0, keepdims=True),
                                   1e-24))                           # (1, T)
    t_raw = t_ref[0]                                                 # (Ct, T)
    tf = t_raw.astype(jnp.float32)
    inv_nt = lax.rsqrt(jnp.maximum(jnp.sum(tf * tf, axis=0, keepdims=True),
                                   1e-24))

    q = q_ref[...]                                                   # (Kc, Ct)
    lt = jnp.dot(q, t_raw.astype(mxu_dtype),
                 preferred_element_type=jnp.float32) * (inv_temp * inv_nt)
    ls = jnp.dot(q, s.astype(mxu_dtype),
                 preferred_element_type=jnp.float32) * (inv_temp * inv_ns)

    # log-softmax over the Kc contrast entries (axis 0, per pixel lane).
    # Both operands are unit-norm so |logit| <= inv_temp: the constant bound
    # replaces the cross-sublane max when inv_temp is moderate.
    if const_max:
        zt = lt - inv_temp
        zs = ls - inv_temp
    else:
        zt = lt - jnp.max(lt, axis=0, keepdims=True)
        zs = ls - jnp.max(ls, axis=0, keepdims=True)

    et = jnp.exp(zt)
    se_t = jnp.sum(et, axis=0, keepdims=True)
    logp_t = zt - jnp.log(se_t)
    p_t = et * pl.reciprocal(se_t, approx=True)      # reuse exp, no exp(logp_t)

    es = jnp.exp(zs)
    se_s = jnp.sum(es, axis=0, keepdims=True)
    logp_s = zs - jnp.log(se_s)

    part = jnp.sum(p_t * (logp_t - logp_s), axis=0, keepdims=True)   # (1, T)

    if need_mask:
        j = pl.program_id(1)
        lane = lax.broadcasted_iota(jnp.int32, part.shape, 1)
        part = jnp.where(lane < (hw_valid - j * tile_hw), part, 0.0)

    out_ref[...] = part.reshape(out_ref.shape)


def kl_partial_sums(xs, ts, w1f, shift, w2m, q_bank, inv_temp, tile_hw,
                    hw_valid, *, mxu_dtype, const_max, compiler_kwargs):
    B, Cs, HWp = xs.shape
    Ct = ts.shape[1]
    Kc = q_bank.shape[0]
    nT = pl.cdiv(HWp, tile_hw)
    need_mask = (HWp % tile_hw) != 0
    kern = functools.partial(p2p_loss_kernel, inv_temp=float(inv_temp),
                             tile_hw=tile_hw, hw_valid=hw_valid,
                             need_mask=need_mask, mxu_dtype=mxu_dtype,
                             const_max=const_max)
    return pl.pallas_call(
        kern,
        out_shape=jax.ShapeDtypeStruct((B, nT, 1, tile_hw), jnp.float32),
        grid=(B, nT),
        in_specs=[
            pl.BlockSpec((1, Cs, tile_hw), lambda b, j: (b, 0, j)),  # x (NCHW)
            pl.BlockSpec((1, Ct, tile_hw), lambda b, j: (b, 0, j)),  # teacher
            pl.BlockSpec((Ct, Cs), lambda b, j: (0, 0)),             # W1*scale
            pl.BlockSpec((Ct, 1), lambda b, j: (0, 0)),              # BN shift
            pl.BlockSpec((Ct, Ct), lambda b, j: (0, 0)),             # W2
            pl.BlockSpec((Kc, Ct), lambda b, j: (0, 0)),             # bank
        ],
        out_specs=pl.BlockSpec((1, 1, 1, tile_hw), lambda b, j: (b, j, 0, 0)),
        compiler_params=pltpu.CompilerParams(
            dimension_semantics=("parallel", "parallel"), **compiler_kwargs),
    )(xs, ts, w1f, shift, w2m, q_bank)


# ----------------------------------------------------------------------------
# Full Memory_p2p_loss forward.
# ----------------------------------------------------------------------------
def memory_p2p_loss_forward(
    s_feats, t_feats, params, *,
    pixel_memory_size, pixel_contrast_size, pixel_update_freq,
    contrast_temperature, contrast_kd_temperature, factor, bn_eps,
    perm_key, queue_ptr=0, max_tile_hw=2048, mxu_dtype=jnp.bfloat16,
    vmem_budget_bytes=None, vmem_limit_bytes=None, return_state=False,
):
    w1 = params["w1"].astype(jnp.float32)        # conv1 weight (Ct, Cs)
    w2 = params["w2"].astype(jnp.float32)        # conv2 weight (Ct, Ct)
    gamma = params["gamma"].astype(jnp.float32)
    beta = params["beta"].astype(jnp.float32)
    queue = params["queue"].astype(jnp.float32)  # (pixel_memory_size, Ct)

    B, Cs, H, W = s_feats.shape
    Ct = t_feats.shape[1]
    HW = H * W
    n_pixels = B * HW
    Kc = pixel_contrast_size

    if vmem_budget_bytes is None or vmem_limit_bytes is None:
        auto_budget, auto_limit = _vmem_defaults()
        vmem_budget_bytes = vmem_budget_bytes or auto_budget
        vmem_limit_bytes = vmem_limit_bytes or auto_limit
    compiler_kwargs = {"vmem_limit_bytes": int(vmem_limit_bytes)}

    # native NCHW views (no transpose, no copies)
    xs = s_feats.reshape(B, Cs, HW)
    ts = t_feats.reshape(B, Ct, HW)

    # ---- _dequeue_and_enqueue (queue bookkeeping, tiny JAX glue) -----------
    # Faithful to `keys.view(C, -1)` on the channel-normalized teacher tensor
    # with one global randperm; only the K sampled pixel columns are gathered
    # (no full-tensor normalize / norm pass).
    perm = jax.random.permutation(perm_key, n_pixels)
    K = min(n_pixels, pixel_update_freq)
    cols = perm[:K].astype(jnp.int32)                       # flat in [0, B*HW)
    q_k = cols // HW                                        # source batch
    p_k = cols % HW                                         # source pixel
    t_cols = jnp.take(ts, p_k, axis=2).astype(jnp.float32)  # (B, Ct, K)
    col_norm = jnp.sqrt(jnp.sum(t_cols * t_cols, axis=1))   # (B, K)

    lin = jnp.arange(Ct, dtype=jnp.int32)[:, None] * B + q_k[None, :]  # (Ct,K)
    b_idx = lin // Ct
    c_idx = lin % Ct
    k_idx = jnp.arange(K, dtype=jnp.int32)[None, :]
    vals = t_cols[b_idx, c_idx, k_idx]                      # (Ct, K)
    norms = col_norm[b_idx, k_idx]                          # (Ct, K)
    feat = (vals / jnp.maximum(norms, 1e-12)).T             # (K, Ct)
    feat = feat * lax.rsqrt(
        jnp.maximum(jnp.sum(feat * feat, axis=1, keepdims=True), 1e-24))
    if queue_ptr + K >= pixel_memory_size:
        queue = lax.dynamic_update_slice(queue, feat,
                                         (pixel_memory_size - K, 0))
        new_ptr = 0
    else:
        queue = lax.dynamic_update_slice(queue, feat, (int(queue_ptr), 0))
        new_ptr = (int(queue_ptr) + K) % pixel_memory_size

    sampled = jnp.round(jnp.linspace(0.0, pixel_memory_size - 1,
                                     pixel_contrast_size)).astype(jnp.int32)
    q_bank = queue[sampled].astype(mxu_dtype)               # (Kc, Ct)

    in_x = _dtype_bytes(s_feats.dtype)
    in_t = _dtype_bytes(t_feats.dtype)
    mb = _dtype_bytes(mxu_dtype)

    # ---- BN batch statistics from x-level partial sums ---------------------
    stats_px_bytes = Cs * (2 * in_x + 4 + mb) + 16
    stats_fixed = 4 * 4 * (Cs * Cs + Cs)
    stats_tile = _choose_tile_hw(HW, stats_px_bytes, fixed_bytes=stats_fixed,
                                 vmem_budget_bytes=vmem_budget_bytes,
                                 max_tile=4096, force_split=(B == 1))
    xtx_p, xsum_p = bn_partial_stats(xs, stats_tile, HW, mxu_dtype=mxu_dtype,
                                     compiler_kwargs=compiler_kwargs)
    xtx = jnp.sum(xtx_p, axis=0)                 # (Cs, Cs)
    xsum = jnp.sum(xsum_p, axis=0)[:, 0]         # (Cs,)

    # analytic BN stats of h = conv1(x) (uncentered f32; biased variance,
    # matching BatchNorm training-mode normalization).
    w1t = w1.T                                   # (Cs, Ct)
    mean_h = (xsum @ w1t) / n_pixels             # (Ct,)
    eh2 = jnp.einsum("ic,ic->c", w1t, xtx @ w1t) / n_pixels
    var_h = jnp.maximum(eh2 - mean_h * mean_h, 0.0)
    scale = gamma * lax.rsqrt(var_h + bn_eps)
    shift = (beta - mean_h * scale).reshape(Ct, 1)           # (Ct, 1), f32
    w1f = (w1 * scale[:, None]).astype(mxu_dtype)            # BN folded into W1
    w2m = w2.astype(mxu_dtype)

    # ---- fused loss kernel --------------------------------------------------
    inv_temp = 1.0 / (contrast_temperature * contrast_kd_temperature)
    const_max = inv_temp <= 30.0
    loss_px_bytes = (2 * Cs * in_x + 2 * Ct * in_t + Cs * mb
                     + Ct * (12 + 3 * mb) + 20 * Kc + 8)
    loss_fixed = 2 * mb * (Ct * Cs + Ct * Ct + Kc * Ct) + 2 * 4 * Ct
    tile_hw = _choose_tile_hw(HW, loss_px_bytes, fixed_bytes=loss_fixed,
                              vmem_budget_bytes=vmem_budget_bytes,
                              max_tile=max_tile_hw, force_split=(B == 1))
    parts = kl_partial_sums(xs, ts, w1f, shift, w2m, q_bank, inv_temp,
                            tile_hw, HW, mxu_dtype=mxu_dtype,
                            const_max=const_max,
                            compiler_kwargs=compiler_kwargs)
    kl_sum = jnp.sum(parts, dtype=jnp.float32)

    # KL(batchmean) * T_kd^2 / HW * factor == kl_sum * T_kd^2 / (B*HW) * factor
    loss = kl_sum * (contrast_kd_temperature ** 2) / n_pixels * factor
    if return_state:
        return loss, {"queue": queue, "queue_ptr": jnp.int32(new_ptr)}
    return loss


# ----------------------------------------------------------------------------
# Pure-JAX reference (mirrors the PyTorch module) used for a numeric check.
# ----------------------------------------------------------------------------
def memory_p2p_loss_reference(
    s_feats, t_feats, params, *,
    pixel_memory_size, pixel_contrast_size, pixel_update_freq,
    contrast_temperature, contrast_kd_temperature, factor, bn_eps,
    perm_key, queue_ptr=0,
):
    eps = 1e-12
    B, Cs, H, W = s_feats.shape
    Ct = t_feats.shape[1]
    HW = H * W

    t = t_feats.astype(jnp.float32)
    t_n = t / jnp.maximum(jnp.sqrt(jnp.sum(t * t, axis=1, keepdims=True)), eps)

    x = s_feats.astype(jnp.float32).reshape(B, Cs, HW)
    w1 = params["w1"].astype(jnp.float32)
    w2 = params["w2"].astype(jnp.float32)
    h = jnp.einsum("oc,bcp->bop", w1, x)
    mean = jnp.mean(h, axis=(0, 2), keepdims=True)
    var = jnp.mean(jnp.square(h - mean), axis=(0, 2), keepdims=True)
    hn = (h - mean) * lax.rsqrt(var + bn_eps)
    hn = hn * params["gamma"].astype(jnp.float32)[None, :, None] \
         + params["beta"].astype(jnp.float32)[None, :, None]
    hn = jnp.maximum(hn, 0.0)
    s = jnp.einsum("oc,bcp->bop", w2, hn)
    s_n = s / jnp.maximum(jnp.sqrt(jnp.sum(s * s, axis=1, keepdims=True)), eps)

    this_feat = t_n.reshape(Ct, B * HW)          # torch .view(C, -1)
    perm = jax.random.permutation(perm_key, B * HW)
    K = min(B * HW, pixel_update_freq)
    feat = this_feat[:, perm[:K]].T
    feat = feat / jnp.maximum(
        jnp.sqrt(jnp.sum(feat * feat, axis=1, keepdims=True)), eps)
    queue = params["queue"].astype(jnp.float32)
    if queue_ptr + K >= pixel_memory_size:
        queue = lax.dynamic_update_slice(queue, feat,
                                         (pixel_memory_size - K, 0))
    else:
        queue = lax.dynamic_update_slice(queue, feat, (int(queue_ptr), 0))
    sampled = jnp.round(jnp.linspace(0.0, pixel_memory_size - 1,
                                     pixel_contrast_size)).astype(jnp.int32)
    bank = queue[sampled]

    tl = jnp.einsum("bcp,kc->bpk", t_n.reshape(B, Ct, HW), bank)
    sl = jnp.einsum("bcp,kc->bpk", s_n, bank)
    tl = tl / contrast_temperature / contrast_kd_temperature
    sl = sl / contrast_temperature / contrast_kd_temperature
    logp_s = jax.nn.log_softmax(sl, axis=2)
    logp_t = jax.nn.log_softmax(tl, axis=2)
    p_t = jnp.exp(logp_t)
    kl = jnp.sum(p_t * (logp_t - logp_s)) / B
    return kl * (contrast_kd_temperature ** 2) / HW * factor


# ----------------------------------------------------------------------------
if __name__ == "__main__":
    key = jax.random.PRNGKey(0)
    (k_s, k_t, k_w1, k_w2, k_q, k_perm,
     k_s2, k_t2, k_perm2) = jax.random.split(key, 9)

    # small synthetic config consistent with the module
    B, Cs, Ct, H, W = 2, 16, 32, 16, 16
    PIXEL_MEMORY_SIZE = 256
    PIXEL_CONTRAST_SIZE = 128
    PIXEL_UPDATE_FREQ = 128
    CONTRAST_TEMP = 0.1
    CONTRAST_KD_TEMP = 1.0
    FACTOR = 0.1
    BN_EPS = 1e-5

    s_feats = jax.random.normal(k_s, (B, Cs, H, W), jnp.float32)
    t_feats = jax.random.normal(k_t, (B, Ct, H, W), jnp.float32)

    w1 = 0.1 * jax.random.normal(k_w1, (Ct, Cs), jnp.float32)
    w2 = 0.1 * jax.random.normal(k_w2, (Ct, Ct), jnp.float32)
    queue = jax.random.normal(k_q, (PIXEL_MEMORY_SIZE, Ct), jnp.float32)
    queue = queue / jnp.maximum(
        jnp.sqrt(jnp.sum(queue * queue, axis=1, keepdims=True)), 1e-12)
    params = {"w1": w1, "w2": w2,
              "gamma": jnp.ones((Ct,), jnp.float32),
              "beta": jnp.zeros((Ct,), jnp.float32),
              "queue": queue}

    cfg = dict(pixel_memory_size=PIXEL_MEMORY_SIZE,
               pixel_contrast_size=PIXEL_CONTRAST_SIZE,
               pixel_update_freq=PIXEL_UPDATE_FREQ,
               contrast_temperature=CONTRAST_TEMP,
               contrast_kd_temperature=CONTRAST_KD_TEMP,
               factor=FACTOR, bn_eps=BN_EPS)

    fwd_fast = jax.jit(functools.partial(memory_p2p_loss_forward, **cfg))
    fwd_f32 = jax.jit(functools.partial(memory_p2p_loss_forward,
                                        mxu_dtype=jnp.float32, **cfg))
    ref_fn = jax.jit(functools.partial(memory_p2p_loss_reference, **cfg))

    # -- aligned config (HW multiple of 128) ---------------------------------
    loss_fast = jax.block_until_ready(
        fwd_fast(s_feats, t_feats, params, perm_key=k_perm))
    loss_f32 = jax.block_until_ready(
        fwd_f32(s_feats, t_feats, params, perm_key=k_perm))
    loss_ref = jax.block_until_ready(
        ref_fn(s_feats, t_feats, params, perm_key=k_perm))
    assert loss_fast.shape == () and bool(jnp.isfinite(loss_fast))
    rel = abs(float(loss_f32) - float(loss_ref)) / max(abs(float(loss_ref)),
                                                       1e-6)
    assert rel < 2e-2, (float(loss_f32), float(loss_ref), rel)

    # -- ragged config (HW not multiple of 128, B == 1 -> forced tile split) --
    B2, H2, W2 = 1, 20, 20
    s2 = jax.random.normal(k_s2, (B2, Cs, H2, W2), jnp.float32)
    t2 = jax.random.normal(k_t2, (B2, Ct, H2, W2), jnp.float32)
    loss2_fast = jax.block_until_ready(fwd_fast(s2, t2, params,
                                                perm_key=k_perm2))
    loss2_f32 = jax.block_until_ready(fwd_f32(s2, t2, params,
                                              perm_key=k_perm2))
    loss2_ref = jax.block_until_ready(ref_fn(s2, t2, params,
                                             perm_key=k_perm2))
    assert bool(jnp.isfinite(loss2_fast))
    rel2 = abs(float(loss2_f32) - float(loss2_ref)) / max(
        abs(float(loss2_ref)), 1e-6)
    assert rel2 < 2e-2, (float(loss2_f32), float(loss2_ref), rel2)

    print("KERNEL_OK")
</pallas_src>

<mosaic_0001>
module attributes {stable_mosaic.version = 11 : i64} {
  func.func private @main(%arg0: i32) attributes {dimension_semantics = [#tpu.dimension_semantics<core_parallel>], iteration_bounds = array<i64: 2>, tpu.core_type = #tpu.core_type<sc_scalar_subcore>, window_params = []} {
    return
  }
}

module attributes {stable_mosaic.version = 11 : i64} {
  func.func private @main(%arg0: i32) attributes {dimension_semantics = [#tpu.dimension_semantics<core_parallel>], iteration_bounds = array<i64: 2>, tpu.core_type = #tpu.core_type<sc_scalar_subcore>, window_params = []} {
    return
  }
}

module attributes {stable_mosaic.version = 11 : i64} {
  func.func @bn_stats_kernel(%arg0: i32, %arg1: i32, %arg2: memref<1x16x256xf32, #tpu.memory_space<vmem>>, %arg3: memref<1x16x16xf32, #tpu.memory_space<vmem>>, %arg4: memref<1x16x1xf32, #tpu.memory_space<vmem>>) attributes {dimension_semantics = [#tpu.dimension_semantics<parallel>, #tpu.dimension_semantics<arbitrary>], iteration_bounds = array<i64: 2, 1>, scalar_prefetch = 0 : i64, scratch_operands = 0 : i64, tpu.core_type = #tpu.core_type<tc>, window_params = [{transform_indices = @transform_0, window_bounds = array<i64: 1, 16, 256>}, {transform_indices = @transform_1, window_bounds = array<i64: 1, 16, 16>}, {transform_indices = @transform_2, window_bounds = array<i64: 1, 16, 1>}]} {
    %c0 = arith.constant 0 : index
    %c0_0 = arith.constant 0 : index
    %c0_1 = arith.constant 0 : index
    %0 = vector.load %arg2[%c0, %c0_0, %c0_1] : memref<1x16x256xf32, #tpu.memory_space<vmem>>, vector<1x16x256xf32>
    %1 = vector.shape_cast %0 : vector<1x16x256xf32> to vector<16x256xf32>
    %2 = arith.truncf %1 : vector<16x256xf32> to vector<16x256xbf16>
    %cst = arith.constant dense<0.000000e+00> : vector<16x16xf32>
    %3 = tpu.matmul %2, %2, %cst {dimension_numbers = #tpu.dot_dimension_numbers<[1], [1], [0], [0], [0, 0, 1, 0], [], []>} : vector<16x256xbf16>, vector<16x256xbf16>, vector<16x16xf32> -> vector<16x16xf32>
    %cst_2 = arith.constant dense<0.000000e+00> : vector<16xf32>
    %4 = vector.multi_reduction <add>, %1, %cst_2 [1] : vector<16x256xf32> to vector<16xf32>
    %5 = vector.shape_cast %4 : vector<16xf32> to vector<16x1xf32>
    %c0_i32 = arith.constant 0 : i32
    %6 = arith.cmpi eq, %arg1, %c0_i32 : i32
    %7 = arith.extui %6 : i1 to i32
    %c0_i32_3 = arith.constant 0 : i32
    %8 = arith.cmpi ne, %7, %c0_i32_3 : i32
    scf.if %8 {
      %cst_16 = arith.constant 0.000000e+00 : f32
      %17 = vector.broadcast %cst_16 : f32 to vector<1x16x16xf32>
      %c0_17 = arith.constant 0 : index
      %c0_18 = arith.constant 0 : index
      %c0_19 = arith.constant 0 : index
      %18 = vector.load %arg3[%c0_17, %c0_18, %c0_19] : memref<1x16x16xf32, #tpu.memory_space<vmem>>, vector<1x16x16xf32>
      tpu.vector_store %arg3[%c0_17, %c0_18, %c0_19], %17 {strides = array<i32>} : memref<1x16x16xf32, #tpu.memory_space<vmem>>, vector<1x16x16xf32>,
      %cst_20 = arith.constant 0.000000e+00 : f32
      %19 = vector.broadcast %cst_20 : f32 to vector<1x16x1xf32>
      %c0_21 = arith.constant 0 : index
      %c0_22 = arith.constant 0 : index
      %c0_23 = arith.constant 0 : index
      %20 = vector.load %arg4[%c0_21, %c0_22, %c0_23] : memref<1x16x1xf32, #tpu.memory_space<vmem>>, vector<1x16x1xf32>
      tpu.vector_store %arg4[%c0_21, %c0_22, %c0_23], %19 {strides = array<i32>} : memref<1x16x1xf32, #tpu.memory_space<vmem>>, vector<1x16x1xf32>,
    } else {
    }
    %c0_4 = arith.constant 0 : index
    %c0_5 = arith.constant 0 : index
    %c0_6 = arith.constant 0 : index
    %9 = vector.load %arg3[%c0_4, %c0_5, %c0_6] : memref<1x16x16xf32, #tpu.memory_space<vmem>>, vector<1x16x16xf32>
    %10 = vector.shape_cast %3 : vector<16x16xf32> to vector<1x16x16xf32>
    %11 = arith.addf %9, %10 : vector<1x16x16xf32>
    %c0_7 = arith.constant 0 : index
    %c0_8 = arith.constant 0 : index
    %c0_9 = arith.constant 0 : index
    %12 = vector.load %arg3[%c0_7, %c0_8, %c0_9] : memref<1x16x16xf32, #tpu.memory_space<vmem>>, vector<1x16x16xf32>
    tpu.vector_store %arg3[%c0_7, %c0_8, %c0_9], %11 {strides = array<i32>} : memref<1x16x16xf32, #tpu.memory_space<vmem>>, vector<1x16x16xf32>,
    %c0_10 = arith.constant 0 : index
    %c0_11 = arith.constant 0 : index
    %c0_12 = arith.constant 0 : index
    %13 = vector.load %arg4[%c0_10, %c0_11, %c0_12] : memref<1x16x1xf32, #tpu.memory_space<vmem>>, vector<1x16x1xf32>
    %14 = vector.shape_cast %5 : vector<16x1xf32> to vector<1x16x1xf32>
    %15 = arith.addf %13, %14 : vector<1x16x1xf32>
    %c0_13 = arith.constant 0 : index
    %c0_14 = arith.constant 0 : index
    %c0_15 = arith.constant 0 : index
    %16 = vector.load %arg4[%c0_13, %c0_14, %c0_15] : memref<1x16x1xf32, #tpu.memory_space<vmem>>, vector<1x16x1xf32>
    tpu.vector_store %arg4[%c0_13, %c0_14, %c0_15], %15 {strides = array<i32>} : memref<1x16x1xf32, #tpu.memory_space<vmem>>, vector<1x16x1xf32>,
    return
  }
  func.func @transform_0(%arg0: i32, %arg1: i32) -> (i32, i32, i32) {
    %c0_i32 = arith.constant 0 : i32
    %c0_i32_0 = arith.constant 0 : i32
    return %arg0, %c0_i32, %arg1 : i32, i32, i32
  }
  func.func @transform_1(%arg0: i32, %arg1: i32) -> (i32, i32, i32) {
    %c0_i32 = arith.constant 0 : i32
    %c0_i32_0 = arith.constant 0 : i32
    %c0_i32_1 = arith.constant 0 : i32
    return %arg0, %c0_i32, %c0_i32_0 : i32, i32, i32
  }
  func.func @transform_2(%arg0: i32, %arg1: i32) -> (i32, i32, i32) {
    %c0_i32 = arith.constant 0 : i32
    %c0_i32_0 = arith.constant 0 : i32
    %c0_i32_1 = arith.constant 0 : i32
    return %arg0, %c0_i32, %c0_i32_0 : i32, i32, i32
  }
}

module attributes {stable_mosaic.version = 11 : i64} {
  func.func @p2p_loss_kernel(%arg0: i32, %arg1: i32, %arg2: memref<1x16x256xf32, #tpu.memory_space<vmem>>, %arg3: memref<1x32x256xf32, #tpu.memory_space<vmem>>, %arg4: memref<32x16xbf16, #tpu.memory_space<vmem>>, %arg5: memref<32x1xf32, #tpu.memory_space<vmem>>, %arg6: memref<32x32xbf16, #tpu.memory_space<vmem>>, %arg7: memref<128x32xbf16, #tpu.memory_space<vmem>>, %arg8: memref<1x1x1x256xf32, #tpu.memory_space<vmem>>) attributes {dimension_semantics = [#tpu.dimension_semantics<parallel>, #tpu.dimension_semantics<parallel>], iteration_bounds = array<i64: 2, 1>, scalar_prefetch = 0 : i64, scratch_operands = 0 : i64, tpu.core_type = #tpu.core_type<tc>, window_params = [{transform_indices = @transform_0, window_bounds = array<i64: 1, 16, 256>}, {transform_indices = @transform_1, window_bounds = array<i64: 1, 32, 256>}, {pipeline_mode = #tpu.pipeline_mode<synchronous>, transform_indices = @transform_2, window_bounds = array<i64: 32, 16>}, {pipeline_mode = #tpu.pipeline_mode<synchronous>, transform_indices = @transform_3, window_bounds = array<i64: 32, 1>}, {pipeline_mode = #tpu.pipeline_mode<synchronous>, transform_indices = @transform_4, window_bounds = array<i64: 32, 32>}, {pipeline_mode = #tpu.pipeline_mode<synchronous>, transform_indices = @transform_5, window_bounds = array<i64: 128, 32>}, {transform_indices = @transform_6, window_bounds = array<i64: 1, 1, 1, 256>}]} {
    %c0 = arith.constant 0 : index
    %c0_0 = arith.constant 0 : index
    %c0_1 = arith.constant 0 : index
    %0 = vector.load %arg2[%c0, %c0_0, %c0_1] : memref<1x16x256xf32, #tpu.memory_space<vmem>>, vector<1x16x256xf32>
    %1 = vector.shape_cast %0 : vector<1x16x256xf32> to vector<16x256xf32>
    %2 = arith.truncf %1 : vector<16x256xf32> to vector<16x256xbf16>
    %c0_2 = arith.constant 0 : index
    %c0_3 = arith.constant 0 : index
    %3 = vector.load %arg4[%c0_2, %c0_3] : memref<32x16xbf16, #tpu.memory_space<vmem>>, vector<32x16xbf16>
    %cst = arith.constant dense<0.000000e+00> : vector<32x256xf32>
    %4 = tpu.matmul %3, %2, %cst {dimension_numbers = #tpu.dot_dimension_numbers<[1], [0], [0], [1], [0, 0, 1, 1], [], []>} : vector<32x16xbf16>, vector<16x256xbf16>, vector<32x256xf32> -> vector<32x256xf32>
    %c0_4 = arith.constant 0 : index
    %c0_5 = arith.constant 0 : index
    %5 = vector.load %arg5[%c0_4, %c0_5] : memref<32x1xf32, #tpu.memory_space<vmem>>, vector<32x1xf32>
    %6 = vector.broadcast %5 : vector<32x1xf32> to vector<32x256xf32>
    %7 = arith.addf %4, %6 : vector<32x256xf32>
    %cst_6 = arith.constant 0.000000e+00 : f32
    %8 = vector.broadcast %cst_6 : f32 to vector<32x256xf32>
    %9 = arith.maximumf %7, %8 : vector<32x256xf32>
    %c0_7 = arith.constant 0 : index
    %c0_8 = arith.constant 0 : index
    %10 = vector.load %arg6[%c0_7, %c0_8] : memref<32x32xbf16, #tpu.memory_space<vmem>>, vector<32x32xbf16>
    %11 = arith.truncf %9 : vector<32x256xf32> to vector<32x256xbf16>
    %cst_9 = arith.constant dense<0.000000e+00> : vector<32x256xf32>
    %12 = tpu.matmul %10, %11, %cst_9 {dimension_numbers = #tpu.dot_dimension_numbers<[1], [0], [0], [1], [0, 0, 1, 1], [], []>} : vector<32x32xbf16>, vector<32x256xbf16>, vector<32x256xf32> -> vector<32x256xf32>
    %13 = arith.mulf %12, %12 : vector<32x256xf32>
    %cst_10 = arith.constant dense<0.000000e+00> : vector<256xf32>
    %14 = vector.multi_reduction <add>, %13, %cst_10 [0] : vector<32x256xf32> to vector<256xf32>
    %15 = vector.shape_cast %14 : vector<256xf32> to vector<1x256xf32>
    %cst_11 = arith.constant 1.000000e-24 : f32
    %16 = vector.broadcast %cst_11 : f32 to vector<1x256xf32>
    %17 = arith.maximumf %15, %16 : vector<1x256xf32>
    %18 = math.rsqrt %17 : vector<1x256xf32>
    %c0_12 = arith.constant 0 : index
    %c0_13 = arith.constant 0 : index
    %c0_14 = arith.constant 0 : index
    %19 = vector.load %arg3[%c0_12, %c0_13, %c0_14] : memref<1x32x256xf32, #tpu.memory_space<vmem>>, vector<1x32x256xf32>
    %20 = vector.shape_cast %19 : vector<1x32x256xf32> to vector<32x256xf32>
    %21 = arith.mulf %20, %20 : vector<32x256xf32>
    %cst_15 = arith.constant dense<0.000000e+00> : vector<256xf32>
    %22 = vector.multi_reduction <add>, %21, %cst_15 [0] : vector<32x256xf32> to vector<256xf32>
    %23 = vector.shape_cast %22 : vector<256xf32> to vector<1x256xf32>
    %cst_16 = arith.constant 1.000000e-24 : f32
    %24 = vector.broadcast %cst_16 : f32 to vector<1x256xf32>
    %25 = arith.maximumf %23, %24 : vector<1x256xf32>
    %26 = math.rsqrt %25 : vector<1x256xf32>
    %c0_17 = arith.constant 0 : index
    %c0_18 = arith.constant 0 : index
    %27 = vector.load %arg7[%c0_17, %c0_18] : memref<128x32xbf16, #tpu.memory_space<vmem>>, vector<128x32xbf16>
    %28 = arith.truncf %20 : vector<32x256xf32> to vector<32x256xbf16>
    %cst_19 = arith.constant dense<0.000000e+00> : vector<128x256xf32>
    %29 = tpu.matmul %27, %28, %cst_19 {dimension_numbers = #tpu.dot_dimension_numbers<[1], [0], [0], [1], [0, 0, 1, 1], [], []>} : vector<128x32xbf16>, vector<32x256xbf16>, vector<128x256xf32> -> vector<128x256xf32>
    %cst_20 = arith.constant 1.000000e+01 : f32
    %30 = vector.broadcast %cst_20 : f32 to vector<1x256xf32>
    %31 = arith.mulf %30, %26 : vector<1x256xf32>
    %32 = vector.broadcast %31 : vector<1x256xf32> to vector<128x256xf32>
    %33 = arith.mulf %29, %32 : vector<128x256xf32>
    %34 = arith.truncf %12 : vector<32x256xf32> to vector<32x256xbf16>
    %cst_21 = arith.constant dense<0.000000e+00> : vector<128x256xf32>
    %35 = tpu.matmul %27, %34, %cst_21 {dimension_numbers = #tpu.dot_dimension_numbers<[1], [0], [0], [1], [0, 0, 1, 1], [], []>} : vector<128x32xbf16>, vector<32x256xbf16>, vector<128x256xf32> -> vector<128x256xf32>
    %cst_22 = arith.constant 1.000000e+01 : f32
    %36 = vector.broadcast %cst_22 : f32 to vector<1x256xf32>
    %37 = arith.mulf %36, %18 : vector<1x256xf32>
    %38 = vector.broadcast %37 : vector<1x256xf32> to vector<128x256xf32>
    %39 = arith.mulf %35, %38 : vector<128x256xf32>
    %cst_23 = arith.constant 1.000000e+01 : f32
    %40 = vector.broadcast %cst_23 : f32 to vector<128x256xf32>
    %41 = arith.subf %33, %40 : vector<128x256xf32>
    %cst_24 = arith.constant 1.000000e+01 : f32
    %42 = vector.broadcast %cst_24 : f32 to vector<128x256xf32>
    %43 = arith.subf %39, %42 : vector<128x256xf32>
    %44 = math.exp %41 : vector<128x256xf32>
    %cst_25 = arith.constant dense<0.000000e+00> : vector<256xf32>
    %45 = vector.multi_reduction <add>, %44, %cst_25 [0] : vector<128x256xf32> to vector<256xf32>
    %46 = vector.shape_cast %45 : vector<256xf32> to vector<1x256xf32>
    %47 = math.log %46 : vector<1x256xf32>
    %48 = vector.broadcast %47 : vector<1x256xf32> to vector<128x256xf32>
    %49 = arith.subf %41, %48 : vector<128x256xf32>
    %50 = tpu.reciprocal %46 {approx = true} : vector<1x256xf32> -> vector<1x256xf32>
    %51 = vector.broadcast %50 : vector<1x256xf32> to vector<128x256xf32>
    %52 = arith.mulf %44, %51 : vector<128x256xf32>
    %53 = math.exp %43 : vector<128x256xf32>
    %cst_26 = arith.constant dense<0.000000e+00> : vector<256xf32>
    %54 = vector.multi_reduction <add>, %53, %cst_26 [0] : vector<128x256xf32> to vector<256xf32>
    %55 = vector.shape_cast %54 : vector<256xf32> to vector<1x256xf32>
    %56 = math.log %55 : vector<1x256xf32>
    %57 = vector.broadcast %56 : vector<1x256xf32> to vector<128x256xf32>
    %58 = arith.subf %43, %57 : vector<128x256xf32>
    %59 = arith.subf %49, %58 : vector<128x256xf32>
    %60 = arith.mulf %52, %59 : vector<128x256xf32>
    %cst_27 = arith.constant dense<0.000000e+00> : vector<256xf32>
    %61 = vector.multi_reduction <add>, %60, %cst_27 [0] : vector<128x256xf32> to vector<256xf32>
    %62 = vector.shape_cast %61 : vector<256xf32> to vector<1x256xf32>
    %63 = vector.shape_cast %62 : vector<1x256xf32> to vector<1x1x1x256xf32>
    %c0_28 = arith.constant 0 : index
    %c0_29 = arith.constant 0 : index
    %c0_30 = arith.constant 0 : index
    %c0_31 = arith.constant 0 : index
    %64 = vector.load %arg8[%c0_28, %c0_29, %c0_30, %c0_31] : memref<1x1x1x256xf32, #tpu.memory_space<vmem>>, vector<1x1x1x256xf32>
    tpu.vector_store %arg8[%c0_28, %c0_29, %c0_30, %c0_31], %63 {strides = array<i32>} : memref<1x1x1x256xf32, #tpu.memory_space<vmem>>, vector<1x1x1x256xf32>,
    return
  }
  func.func @transform_0(%arg0: i32, %arg1: i32) -> (i32, i32, i32) {
    %c0_i32 = arith.constant 0 : i32
    %c0_i32_0 = arith.constant 0 : i32
    return %arg0, %c0_i32, %arg1 : i32, i32, i32
  }
  func.func @transform_1(%arg0: i32, %arg1: i32) -> (i32, i32, i32) {
    %c0_i32 = arith.constant 0 : i32
    %c0_i32_0 = arith.constant 0 : i32
    return %arg0, %c0_i32, %arg1 : i32, i32, i32
  }
  func.func @transform_2(%arg0: i32, %arg1: i32) -> (i32, i32) {
    %c0_i32 = arith.constant 0 : i32
    %c0_i32_0 = arith.constant 0 : i32
    %c0_i32_1 = arith.constant 0 : i32
    return %c0_i32, %c0_i32_0 : i32, i32
  }
  func.func @transform_3(%arg0: i32, %arg1: i32) -> (i32, i32) {
    %c0_i32 = arith.constant 0 : i32
    %c0_i32_0 = arith.constant 0 : i32
    %c0_i32_1 = arith.constant 0 : i32
    return %c0_i32, %c0_i32_0 : i32, i32
  }
  func.func @transform_4(%arg0: i32, %arg1: i32) -> (i32, i32) {
    %c0_i32 = arith.constant 0 : i32
    %c0_i32_0 = arith.constant 0 : i32
    %c0_i32_1 = arith.constant 0 : i32
    return %c0_i32, %c0_i32_0 : i32, i32
  }
  func.func @transform_5(%arg0: i32, %arg1: i32) -> (i32, i32) {
    %c0_i32 = arith.constant 0 : i32
    %c0_i32_0 = arith.constant 0 : i32
    %c0_i32_1 = arith.constant 0 : i32
    return %c0_i32, %c0_i32_0 : i32, i32
  }
  func.func @transform_6(%arg0: i32, %arg1: i32) -> (i32, i32, i32, i32) {
    %c0_i32 = arith.constant 0 : i32
    %c0_i32_0 = arith.constant 0 : i32
    %c0_i32_1 = arith.constant 0 : i32
    return %arg0, %arg1, %c0_i32, %c0_i32_0 : i32, i32, i32, i32
  }
}

</mosaic_0001>

<llo_original>
// kernel: memory_p2p_loss_forward.2
$region0: #{memory_p2p_loss_forward.2}
  #allocation0 [shape = 'u32[]', space=smem, size = 0x4, offset = 0x4, fixed_abs, tag = 'smem constant byte address 0x4 - core index']
  #allocation1 [shape = 'u32[144,128]{1,0:T(1,128)}', space=vmem, size = 0x12000, scoped, tag = 'internal scratch']
  %s0 = inlined_call_operand.vmem [shape: f32[2,16,256], index: 0, kind: input, shape index: {}]
  %s1 = inlined_call_operand.vmem [shape: f32[2,16,16], index: 1, kind: output, shape index: {0}]
  %s2 = inlined_call_operand.vmem [shape: f32[2,16,1], index: 2, kind: output, shape index: {1}]
  %3 = xla_tuple %s1, %s2
  %s4 = sld [smem:[#allocation0]]
  $region49: #{memory_p2p_loss_forward.2} parent=0
    _
  %s6 = ssub.s32 1, %s4
  %s7 = scalar_select 0, %s6, %s4
  loop: start=0, step=1, limit=4
  $region2: #{memory_p2p_loss_forward.2} parent=0 // loop_pre_header
    _
  $region3: #{memory_p2p_loss_forward.2} parent=0 // loop_header
    %s9 = sphi 0, %s13
    %p10 = scmp.ge.s32.totalorder %s9, 4
    %s16 = sphi 0, %s28
    %s17 = sphi 0, %s24
    %s18 = sphi 0, %s16
    %s19 = sphi 0, %s17
    %s20 = sphi 0, %s18
    %s21 = sphi 0, %s19
    %s33 = sphi 0, %s35
    %s36 = sphi 0, %s33
    %s37 = sphi 0, %s36
    %s53 = sphi 0, %s37
    %s59 = sphi 0, %s61
    %s62 = sphi 0, %s59
    %s63 = sphi 0, %s62
    %s79 = sphi 0, %s63
    %s85 = sphi 0, %s87
    %s88 = sphi 0, %s85
    %s89 = sphi 0, %s88
    %s105 = sphi 0, %s89
  $region4: #{memory_p2p_loss_forward.2} parent=0 // loop_header_branch
    %12 = sbr.rel (%p10) target = $region8
  $region5: #{memory_p2p_loss_forward.2} parent=0 // loop_body
    %s14 = ssub.s32 %s9, 1
    %s15 = ssub.s32 %s9, 2
    %s22 = sadd.s32 1, %s17
    %p23 = scmp.ge.s32.totalorder %s22, 1
    %s24 = scalar_select %p23, 0, %s22
    %s25 = sadd.s32 1, %s16
    %s26 = scalar_select %p23, %s25, %s16
    %p27 = scmp.ge.s32.totalorder %s26, 2
    %s28 = scalar_select %p27, 0, %s26
    %s29 = ssub.s32 %s16, %s28
    %s30 = ssub.s32 %s17, %s24
    %s31 = sor.u32 %s29, %s30
    %p32 = scmp.eq.s32.totalorder %s31, 0
    %s34 = sadd.s32 %s33, 1
    %s35 = scalar_select %p32, %s33, %s34
    %p38 = pneg %p32
    %p39 = scmp.eq.s32.totalorder %s9, 1
    %p40 = por %p38, %p39
    %p41 = scmp.ne.s32.totalorder %s33, %s36
    %p42 = scmp.eq.s32.totalorder %s9, 0
    %p43 = por %p41, %p42
    %p44 = scmp.ne.s32.totalorder %s33, %s36
    %p45 = scmp.eq.s32.totalorder %s14, 1
    %p46 = por %p44, %p45
    %p47 = scmp.ne.s32.totalorder %s36, %s37
    %p48 = scmp.eq.s32.totalorder %s14, 0
    %p49 = por %p47, %p48
    %p50 = scmp.ne.s32.totalorder %s36, %s37
    %p51 = scmp.eq.s32.totalorder %s15, 1
    %p52 = por %p50, %p51
    %p54 = scmp.ne.s32.totalorder %s37, %s53
    %p55 = scmp.eq.s32.totalorder %s15, 0
    %p56 = por %p54, %p55
    %s57 = ssub.s32 %s16, %s28
    %p58 = scmp.eq.s32.totalorder %s57, 0
    %s60 = sadd.s32 %s59, 1
    %s61 = scalar_select %p58, %s59, %s60
    %p64 = pneg %p58
    %p65 = scmp.eq.s32.totalorder %s9, 1
    %p66 = por %p64, %p65
    %p67 = scmp.ne.s32.totalorder %s59, %s62
    %p68 = scmp.eq.s32.totalorder %s9, 0
    %p69 = por %p67, %p68
    %p70 = scmp.ne.s32.totalorder %s59, %s62
    %p71 = scmp.eq.s32.totalorder %s14, 1
    %p72 = por %p70, %p71
    %p73 = scmp.ne.s32.totalorder %s62, %s63
    %p74 = scmp.eq.s32.totalorder %s14, 0
    %p75 = por %p73, %p74
    %p76 = scmp.ne.s32.totalorder %s62, %s63
    %p77 = scmp.eq.s32.totalorder %s15, 1
    %p78 = por %p76, %p77
    %p80 = scmp.ne.s32.totalorder %s63, %s79
    %p81 = scmp.eq.s32.totalorder %s15, 0
    %p82 = por %p80, %p81
    %s83 = ssub.s32 %s16, %s28
    %p84 = scmp.eq.s32.totalorder %s83, 0
    %s86 = sadd.s32 %s85, 1
    %s87 = scalar_select %p84, %s85, %s86
    %p90 = pneg %p84
    %p91 = scmp.eq.s32.totalorder %s9, 1
    %p92 = por %p90, %p91
    %p93 = scmp.ne.s32.totalorder %s85, %s88
    %p94 = scmp.eq.s32.totalorder %s9, 0
    %p95 = por %p93, %p94
    %p96 = scmp.ne.s32.totalorder %s85, %s88
    %p97 = scmp.eq.s32.totalorder %s14, 1
    %p98 = por %p96, %p97
    %p99 = scmp.ne.s32.totalorder %s88, %s89
    %p100 = scmp.eq.s32.totalorder %s14, 0
    %p101 = por %p99, %p100
    %p102 = scmp.ne.s32.totalorder %s88, %s89
    %p103 = scmp.eq.s32.totalorder %s15, 1
    %p104 = por %p102, %p103
    %p106 = scmp.ne.s32.totalorder %s89, %s105
    %p107 = scmp.eq.s32.totalorder %s15, 0
    %p108 = por %p106, %p107
    %p109 = scmp.le.s32.totalorder 1, %s9
    %p110 = scmp.lt.s32.totalorder %s9, 3
    %p111 = pnand %p109, %p110
    %p112 = pneg %p111
    // Predicated region
    $region9: #{memory_p2p_loss_forward.2} parent=5 // pred_check
      _
    $region10: #{memory_p2p_loss_forward.2} parent=5 // pred_check_branch
      %114 = sbr.rel (%p111) target = $region12
    $region11: #{memory_p2p_loss_forward.2} parent=5 // pred_region
      %s115 = ssub.s32 %s9, 1
    $region12: #{memory_p2p_loss_forward.2} parent=5 // pred_fallthru
      _
    %p116 = scmp.lt.s32.totalorder %s9, 2
    // Predicated region
    $region13: #{memory_p2p_loss_forward.2} parent=5 // pred_check
      %p117 = pneg %p116
    $region14: #{memory_p2p_loss_forward.2} parent=5 // pred_check_branch
      %119 = sbr.rel (%p117) target = $region16
    $region15: #{memory_p2p_loss_forward.2} parent=5 // pred_region
      // Predicated region
      $region17: #{memory_p2p_loss_forward.2} parent=15 // pred_check
        %p120 = pneg %p43
      $region18: #{memory_p2p_loss_forward.2} parent=15 // pred_check_branch
        %122 = sbr.rel (%p120) target = $region20
      $region19: #{memory_p2p_loss_forward.2} parent=15 // pred_region
        %s123 = smul.u32 2, %s17
        %p124 = scmp.lt.s32.totalorder %s16, 1
        %s125 = scalar_select %p124, %s16, 1
        %p126 = scmp.lt.s32.totalorder %s123, 1
        %s127 = scalar_select %p126, %s123, 1
        %s128 = smul.addr %s125, 4
        %s129 = sadd.s32 %s127, %s128
        %s130 = smul.addr %s129, 8
        %s131 = scalar_lea.vmem %s0, %s130
        %s132 = smul.u32 2, %s17
      $region20: #{memory_p2p_loss_forward.2} parent=15 // pred_fallthru
        _
    $region16: #{memory_p2p_loss_forward.2} parent=5 // pred_fallthru
      _
    %p133 = scmp.le.s32.totalorder 1, %s9
    %p134 = scmp.lt.s32.totalorder %s9, 3
    %p135 = pnand %p133, %p134
    %p136 = pneg %p135
    // Predicated region
    $region21: #{memory_p2p_loss_forward.2} parent=5 // pred_check
      _
    $region22: #{memory_p2p_loss_forward.2} parent=5 // pred_check_branch
      %138 = sbr.rel (%p135) target = $region24
    $region23: #{memory_p2p_loss_forward.2} parent=5 // pred_region
      %s139 = ssub.s32 %s9, 1
      %s140 = smul.u32 2, %s19
      %p141 = scmp.lt.s32.totalorder %s18, 1
      %s142 = scalar_select %p141, %s18, 1
      %p143 = scmp.lt.s32.totalorder %s140, 1
      %s144 = scalar_select %p143, %s140, 1
      %s145 = smul.addr %s142, 4
      %s146 = sadd.s32 %s144, %s145
      %s147 = smul.addr %s146, 8
      %s148 = scalar_lea.vmem %s0, %s147
      %p149 = pneg %p49
      %p150 = pneg %p46
      %p151 = pneg %p75
      %p152 = pneg %p72
      %p153 = scmp.lt.s32.totalorder %s18, 1
      %s154 = scalar_select %p153, %s18, 1
      %s155 = smul.addr %s154, 2
      %s156 = smul.addr %s155, 8
      %s157 = scalar_lea.vmem %s1, %s156
      %p158 = pneg %p101
      %p159 = pneg %p98
      %p160 = scmp.lt.s32.totalorder %s18, 1
      %s161 = scalar_select %p160, %s18, 1
      %s162 = smul.addr %s161, 2
      %s163 = smul.addr %s162, 8
      %s164 = scalar_lea.vmem %s2, %s163
      %s165 = smul.u32 2, %s19
      %p166 = scmp.lt.s32.totalorder %s18, 1
      %s167 = scalar_select %p166, %s18, 1
      %p168 = scmp.lt.s32.totalorder %s165, 1
      %s169 = scalar_select %p168, %s165, 1
      %s170 = smul.addr %s167, 4
      %s171 = sadd.s32 %s169, %s170
      %s172 = smul.addr %s171, 8
      %s173 = scalar_lea.vmem %s0, %s172
      %s174 = smul.u32 2, %s19
      %p175 = scmp.lt.s32.totalorder %s18, 1
      %s176 = scalar_select %p175, %s18, 1
      %s177 = smul.addr %s176, 2
      %s178 = smul.addr %s177, 8
      %s179 = scalar_lea.vmem %s1, %s178
      %p180 = scmp.lt.s32.totalorder %s18, 1
      %s181 = scalar_select %p180, %s18, 1
      %s182 = smul.addr %s181, 2
      %s183 = smul.addr %s182, 8
      %s184 = scalar_lea.vmem %s2, %s183
      %v186 = vld [vmem:[%s173] sm:$0xff]
      %v187 = vld [vmem:[%s173 + $0x8] sm:$0xff]
      %v188 = vld [vmem:[%s173 + $0x10] sm:$0xff]
      %v189 = vld [vmem:[%s173 + $0x18] sm:$0xff]
      %v190 = vpack.c.bf16 %v188, %v186
      %v191 = vpack.c.bf16 %v189, %v187
      %192 = vmatprep.subr.bf16.mxu0 %v191
      %193 = vmatpush1.bf16.xpose.msra.mxu0 %v190
      %194 = vmatprep.subr.bf16.mxu0 0
      %195 = vmatpush1.bf16.xpose.msra.mxu0 0
      %196 = vmatprep.subr.bf16.mxu0 0
      %197 = vmatpush1.bf16.xpose.msra.mxu0 0
      %198 = vmatprep.subr.bf16.mxu0 0
      %199 = vmatpush1.bf16.xpose.msra.mxu0 0
      %200 = vmatprep.subr.bf16.mxu0 0
      %201 = vmatpush1.bf16.xpose.msra.mxu0 0
      %202 = vmatprep.subr.bf16.mxu0 0
      %203 = vmatpush1.bf16.xpose.msra.mxu0 0
      %204 = vmatprep.subr.bf16.mxu0 0
      %205 = vmatpush1.bf16.xpose.msra.mxu0 0
      %206 = vmatprep.subr.bf16.mxu0 0
      %207 = vmatpush1.bf16.xpose.msra.mxu0 0
      %208 = vmatprep.subr.bf16.mxu0 0
      %209 = vmatpush1.bf16.xpose.msra.mxu0 0
      %210 = vmatprep.subr.bf16.mxu0 0
      %211 = vmatpush1.bf16.xpose.msra.mxu0 0
      %212 = vmatprep.subr.bf16.mxu0 0
      %213 = vmatpush1.bf16.xpose.msra.mxu0 0
      %214 = vmatprep.subr.bf16.mxu0 0
      %215 = vmatpush1.bf16.xpose.msra.mxu0 0
      %216 = vmatprep.subr.bf16.mxu0 0
      %217 = vmatpush1.bf16.xpose.msra.mxu0 0
      %218 = vmatprep.subr.bf16.mxu0 0
      %219 = vmatpush1.bf16.xpose.msra.mxu0 0
      %220 = vmatprep.subr.bf16.mxu0 0
      %221 = vmatpush1.bf16.xpose.msra.mxu0 0
      %222 = vmatprep.subr.bf16.mxu0 0
      %223 = vmatpush1.bf16.xpose.msra.mxu0 0
      %224 = vmatprep.mubr.bf16.mxu0 %v191
      %225 = vmatmul.mubr.bf16.gmra.mrb[0].mxu0 %v190
      %v226 = vpop.f32.mrb[0].mxu0
      %v227 = vadd.f32 0.0, %v226
      %v228 = vpop.f32.mrb[0].mxu0
      %v229 = vpop.f32.mrb[0].mxu0
      %v230 = vadd.f32 0.0, %v229
      %v231 = vpop.f32.mrb[0].mxu0
      %232 = vdwg.mxu0
      %v233 = vadd.f32 %v186, %v187
      %234 = vadd.xlane.f32.xlu0 %v233
      %v235 = vpop.xlane.xlu0 %234
      %v236 = vadd.f32 %v188, %v189
      %237 = vadd.xlane.f32.xlu0 %v236
      %v238 = vpop.xlane.xlu0 %237
      %p239 = scmp.eq.s32.totalorder %s19, 0
      // Predicated region
      $region25: #{memory_p2p_loss_forward.2} parent=23 // pred_check
        %p240 = pneg %p239
      $region26: #{memory_p2p_loss_forward.2} parent=23 // pred_check_branch
        %242 = sbr.rel (%p240) target = $region28
      $region27: #{memory_p2p_loss_forward.2} parent=23 // pred_region
        %vm243 = vcmask 130048
        %244 = vst.msk [vmem:[%s179] sm:$0xff] %vm243, 0.0
        %245 = vst.msk [vmem:[%s179 + $0x8] sm:$0xff] %vm243, 0.0
        %vm246 = vcmask 7168
        %247 = vst.msk [vmem:[%s184] sm:$0xff] %vm246, 0.0
        %248 = vst.msk [vmem:[%s184 + $0x8] sm:$0xff] %vm246, 0.0
      $region28: #{memory_p2p_loss_forward.2} parent=23 // pred_fallthru
        _
      %v249 = vld [vmem:[%s179] sm:$0xff]
      %v250 = vld [vmem:[%s179 + $0x8] sm:$0xff]
      %v251 = vadd.f32 %v249, %v227
      %v252 = vadd.f32 %v250, %v230
      %vm253 = vcmask 130048
      %254 = vst.msk [vmem:[%s179] sm:$0xff] %vm253, %v251
      %255 = vst.msk [vmem:[%s179 + $0x8] sm:$0xff] %vm253, %v252
      %v256 = vld [vmem:[%s184] sm:$0xff]
      %v257 = vld [vmem:[%s184 + $0x8] sm:$0xff]
      %v258 = vadd.f32 %v256, %v235
      %v259 = vadd.f32 %v257, %v238
      %vm260 = vcmask 7168
      %261 = vst.msk [vmem:[%s184] sm:$0xff] %vm260, %v258
      %262 = vst.msk [vmem:[%s184 + $0x8] sm:$0xff] %vm260, %v259
      %p263 = scmp.lt.s32.totalorder %s18, 1
      %s264 = scalar_select %p263, %s18, 1
      %s265 = smul.addr %s264, 2
      %s266 = smul.addr %s265, 8
      %s267 = scalar_lea.vmem %s1, %s266
      %p268 = scmp.lt.s32.totalorder %s18, 1
      %s269 = scalar_select %p268, %s18, 1
      %s270 = smul.addr %s269, 2
      %s271 = smul.addr %s270, 8
      %s272 = scalar_lea.vmem %s2, %s271
      // Predicated region
      $region29: #{memory_p2p_loss_forward.2} parent=23 // pred_check
        %p273 = pneg %p72
      $region30: #{memory_p2p_loss_forward.2} parent=23 // pred_check_branch
        %275 = sbr.rel (%p273) target = $region32
      $region31: #{memory_p2p_loss_forward.2} parent=23 // pred_region
        _
      $region32: #{memory_p2p_loss_forward.2} parent=23 // pred_fallthru
        _
      // Predicated region
      $region33: #{memory_p2p_loss_forward.2} parent=23 // pred_check
        %p276 = pneg %p98
      $region34: #{memory_p2p_loss_forward.2} parent=23 // pred_check_branch
        %278 = sbr.rel (%p276) target = $region36
      $region35: #{memory_p2p_loss_forward.2} parent=23 // pred_region
        _
      $region36: #{memory_p2p_loss_forward.2} parent=23 // pred_fallthru
        _
    $region24: #{memory_p2p_loss_forward.2} parent=5 // pred_fallthru
      _
    %p279 = scmp.le.s32.totalorder 2, %s9
    // Predicated region
    $region37: #{memory_p2p_loss_forward.2} parent=5 // pred_check
      %p280 = pneg %p279
    $region38: #{memory_p2p_loss_forward.2} parent=5 // pred_check_branch
      %282 = sbr.rel (%p280) target = $region40
    $region39: #{memory_p2p_loss_forward.2} parent=5 // pred_region
      %s283 = ssub.s32 %s9, 2
      // Predicated region
      $region41: #{memory_p2p_loss_forward.2} parent=39 // pred_check
        %p284 = pneg %p78
      $region42: #{memory_p2p_loss_forward.2} parent=39 // pred_check_branch
        %286 = sbr.rel (%p284) target = $region44
      $region43: #{memory_p2p_loss_forward.2} parent=39 // pred_region
        %p287 = scmp.lt.s32.totalorder %s20, 1
        %s288 = scalar_select %p287, %s20, 1
        %s289 = smul.addr %s288, 2
        %s290 = smul.addr %s289, 8
        %s291 = scalar_lea.vmem %s1, %s290
      $region44: #{memory_p2p_loss_forward.2} parent=39 // pred_fallthru
        _
      // Predicated region
      $region45: #{memory_p2p_loss_forward.2} parent=39 // pred_check
        %p292 = pneg %p104
      $region46: #{memory_p2p_loss_forward.2} parent=39 // pred_check_branch
        %294 = sbr.rel (%p292) target = $region48
      $region47: #{memory_p2p_loss_forward.2} parent=39 // pred_region
        %p295 = scmp.lt.s32.totalorder %s20, 1
        %s296 = scalar_select %p295, %s20, 1
        %s297 = smul.addr %s296, 2
        %s298 = smul.addr %s297, 8
        %s299 = scalar_lea.vmem %s2, %s298
      $region48: #{memory_p2p_loss_forward.2} parent=39 // pred_fallthru
        _
    $region40: #{memory_p2p_loss_forward.2} parent=5 // pred_fallthru
      _
  $region6: #{memory_p2p_loss_forward.2} parent=0 // loop_footer
    %s13 = sadd.s32 1, %s9
  $region7: #{memory_p2p_loss_forward.2} parent=0 // loop_footer_branch
    %8 = sbr.rel target = $region3
  $region8: #{memory_p2p_loss_forward.2} parent=0 // loop_exit
    _

// kernel: memory_p2p_loss_forward.3
$region0: #{memory_p2p_loss_forward.3}
  #allocation0 [shape = 'u32[]', space=smem, size = 0x4, offset = 0x4, fixed_abs, tag = 'smem constant byte address 0x4 - core index']
  #allocation1 [shape = 'u32[144,128]{1,0:T(1,128)}', space=vmem, size = 0x12000, scoped, tag = 'internal scratch']
  %s0 = inlined_call_operand.vmem [shape: f32[2,16,256], index: 0, kind: input, shape index: {}]
  %s1 = inlined_call_operand.vmem [shape: f32[2,32,256], index: 1, kind: input, shape index: {}]
  %s2 = inlined_call_operand.vmem [shape: bf16[32,16], index: 2, kind: input, shape index: {}]
  %s3 = inlined_call_operand.vmem [shape: f32[32,1], index: 3, kind: input, shape index: {}]
  %s4 = inlined_call_operand.vmem [shape: bf16[32,32], index: 4, kind: input, shape index: {}]
  %s5 = inlined_call_operand.vmem [shape: bf16[128,32], index: 5, kind: input, shape index: {}]
  %s6 = inlined_call_operand.vmem [shape: f32[2,1,1,256], index: 6, kind: output, shape index: {}]
  %s7 = sld [smem:[#allocation0]]
  $region57: #{memory_p2p_loss_forward.3} parent=0
    _
  %s9 = ssub.s32 1, %s7
  %s10 = scalar_select 0, %s9, %s7
  loop: start=0, step=1, limit=4
  $region2: #{memory_p2p_loss_forward.3} parent=0 // loop_pre_header
    _
  $region3: #{memory_p2p_loss_forward.3} parent=0 // loop_header
    %s12 = sphi 0, %s16
    %p13 = scmp.ge.s32.totalorder %s12, 4
    %s19 = sphi 0, %s31
    %s20 = sphi 0, %s27
    %s21 = sphi 0, %s19
    %s22 = sphi 0, %s20
    %s23 = sphi 0, %s21
    %s24 = sphi 0, %s22
    %s36 = sphi 0, %s38
    %s39 = sphi 0, %s36
    %s40 = sphi 0, %s39
    %s56 = sphi 0, %s40
    %s64 = sphi 0, %s66
    %s67 = sphi 0, %s64
    %s68 = sphi 0, %s67
    %s84 = sphi 0, %s68
    %s88 = sphi 0, %s88
    %s90 = sphi 0, %s88
    %s91 = sphi 0, %s90
    %s105 = sphi 0, %s91
    %s109 = sphi 0, %s109
    %s111 = sphi 0, %s109
    %s112 = sphi 0, %s111
    %s126 = sphi 0, %s112
    %s130 = sphi 0, %s130
    %s132 = sphi 0, %s130
    %s133 = sphi 0, %s132
    %s147 = sphi 0, %s133
    %s151 = sphi 0, %s151
    %s153 = sphi 0, %s151
    %s154 = sphi 0, %s153
    %s168 = sphi 0, %s154
    %s176 = sphi 0, %s178
    %s179 = sphi 0, %s176
    %s180 = sphi 0, %s179
    %s196 = sphi 0, %s180
  $region4: #{memory_p2p_loss_forward.3} parent=0 // loop_header_branch
    %15 = sbr.rel (%p13) target = $region8
  $region5: #{memory_p2p_loss_forward.3} parent=0 // loop_body
    %s17 = ssub.s32 %s12, 1
    %s18 = ssub.s32 %s12, 2
    %s25 = sadd.s32 1, %s20
    %p26 = scmp.ge.s32.totalorder %s25, 1
    %s27 = scalar_select %p26, 0, %s25
    %s28 = sadd.s32 1, %s19
    %s29 = scalar_select %p26, %s28, %s19
    %p30 = scmp.ge.s32.totalorder %s29, 2
    %s31 = scalar_select %p30, 0, %s29
    %s32 = ssub.s32 %s19, %s31
    %s33 = ssub.s32 %s20, %s27
    %s34 = sor.u32 %s32, %s33
    %p35 = scmp.eq.s32.totalorder %s34, 0
    %s37 = sadd.s32 %s36, 1
    %s38 = scalar_select %p35, %s36, %s37
    %p41 = pneg %p35
    %p42 = scmp.eq.s32.totalorder %s12, 1
    %p43 = por %p41, %p42
    %p44 = scmp.ne.s32.totalorder %s36, %s39
    %p45 = scmp.eq.s32.totalorder %s12, 0
    %p46 = por %p44, %p45
    %p47 = scmp.ne.s32.totalorder %s36, %s39
    %p48 = scmp.eq.s32.totalorder %s17, 1
    %p49 = por %p47, %p48
    %p50 = scmp.ne.s32.totalorder %s39, %s40
    %p51 = scmp.eq.s32.totalorder %s17, 0
    %p52 = por %p50, %p51
    %p53 = scmp.ne.s32.totalorder %s39, %s40
    %p54 = scmp.eq.s32.totalorder %s18, 1
    %p55 = por %p53, %p54
    %p57 = scmp.ne.s32.totalorder %s40, %s56
    %p58 = scmp.eq.s32.totalorder %s18, 0
    %p59 = por %p57, %p58
    %s60 = ssub.s32 %s19, %s31
    %s61 = ssub.s32 %s20, %s27
    %s62 = sor.u32 %s60, %s61
    %p63 = scmp.eq.s32.totalorder %s62, 0
    %s65 = sadd.s32 %s64, 1
    %s66 = scalar_select %p63, %s64, %s65
    %p69 = pneg %p63
    %p70 = scmp.eq.s32.totalorder %s12, 1
    %p71 = por %p69, %p70
    %p72 = scmp.ne.s32.totalorder %s64, %s67
    %p73 = scmp.eq.s32.totalorder %s12, 0
    %p74 = por %p72, %p73
    %p75 = scmp.ne.s32.totalorder %s64, %s67
    %p76 = scmp.eq.s32.totalorder %s17, 1
    %p77 = por %p75, %p76
    %p78 = scmp.ne.s32.totalorder %s67, %s68
    %p79 = scmp.eq.s32.totalorder %s17, 0
    %p80 = por %p78, %p79
    %p81 = scmp.ne.s32.totalorder %s67, %s68
    %p82 = scmp.eq.s32.totalorder %s18, 1
    %p83 = por %p81, %p82
    %p85 = scmp.ne.s32.totalorder %s68, %s84
    %p86 = scmp.eq.s32.totalorder %s18, 0
    %p87 = por %p85, %p86
    %s89 = sadd.s32 %s88, 1
    %p92 = scmp.eq.s32.totalorder %s12, 1
    %p93 = scmp.ne.s32.totalorder %s88, %s90
    %p94 = scmp.eq.s32.totalorder %s12, 0
    %p95 = por %p93, %p94
    %p96 = scmp.ne.s32.totalorder %s88, %s90
    %p97 = scmp.eq.s32.totalorder %s17, 1
    %p98 = por %p96, %p97
    %p99 = scmp.ne.s32.totalorder %s90, %s91
    %p100 = scmp.eq.s32.totalorder %s17, 0
    %p101 = por %p99, %p100
    %p102 = scmp.ne.s32.totalorder %s90, %s91
    %p103 = scmp.eq.s32.totalorder %s18, 1
    %p104 = por %p102, %p103
    %p106 = scmp.ne.s32.totalorder %s91, %s105
    %p107 = scmp.eq.s32.totalorder %s18, 0
    %p108 = por %p106, %p107
    %s110 = sadd.s32 %s109, 1
    %p113 = scmp.eq.s32.totalorder %s12, 1
    %p114 = scmp.ne.s32.totalorder %s109, %s111
    %p115 = scmp.eq.s32.totalorder %s12, 0
    %p116 = por %p114, %p115
    %p117 = scmp.ne.s32.totalorder %s109, %s111
    %p118 = scmp.eq.s32.totalorder %s17, 1
    %p119 = por %p117, %p118
    %p120 = scmp.ne.s32.totalorder %s111, %s112
    %p121 = scmp.eq.s32.totalorder %s17, 0
    %p122 = por %p120, %p121
    %p123 = scmp.ne.s32.totalorder %s111, %s112
    %p124 = scmp.eq.s32.totalorder %s18, 1
    %p125 = por %p123, %p124
    %p127 = scmp.ne.s32.totalorder %s112, %s126
    %p128 = scmp.eq.s32.totalorder %s18, 0
    %p129 = por %p127, %p128
    %s131 = sadd.s32 %s130, 1
    %p134 = scmp.eq.s32.totalorder %s12, 1
    %p135 = scmp.ne.s32.totalorder %s130, %s132
    %p136 = scmp.eq.s32.totalorder %s12, 0
    %p137 = por %p135, %p136
    %p138 = scmp.ne.s32.totalorder %s130, %s132
    %p139 = scmp.eq.s32.totalorder %s17, 1
    %p140 = por %p138, %p139
    %p141 = scmp.ne.s32.totalorder %s132, %s133
    %p142 = scmp.eq.s32.totalorder %s17, 0
    %p143 = por %p141, %p142
    %p144 = scmp.ne.s32.totalorder %s132, %s133
    %p145 = scmp.eq.s32.totalorder %s18, 1
    %p146 = por %p144, %p145
    %p148 = scmp.ne.s32.totalorder %s133, %s147
    %p149 = scmp.eq.s32.totalorder %s18, 0
    %p150 = por %p148, %p149
    %s152 = sadd.s32 %s151, 1
    %p155 = scmp.eq.s32.totalorder %s12, 1
    %p156 = scmp.ne.s32.totalorder %s151, %s153
    %p157 = scmp.eq.s32.totalorder %s12, 0
    %p158 = por %p156, %p157
    %p159 = scmp.ne.s32.totalorder %s151, %s153
    %p160 = scmp.eq.s32.totalorder %s17, 1
    %p161 = por %p159, %p160
    %p162 = scmp.ne.s32.totalorder %s153, %s154
    %p163 = scmp.eq.s32.totalorder %s17, 0
    %p164 = por %p162, %p163
    %p165 = scmp.ne.s32.totalorder %s153, %s154
    %p166 = scmp.eq.s32.totalorder %s18, 1
    %p167 = por %p165, %p166
    %p169 = scmp.ne.s32.totalorder %s154, %s168
    %p170 = scmp.eq.s32.totalorder %s18, 0
    %p171 = por %p169, %p170
    %s172 = ssub.s32 %s19, %s31
    %s173 = ssub.s32 %s20, %s27
    %s174 = sor.u32 %s172, %s173
    %p175 = scmp.eq.s32.totalorder %s174, 0
    %s177 = sadd.s32 %s176, 1
    %s178 = scalar_select %p175, %s176, %s177
    %p181 = pneg %p175
    %p182 = scmp.eq.s32.totalorder %s12, 1
    %p183 = por %p181, %p182
    %p184 = scmp.ne.s32.totalorder %s176, %s179
    %p185 = scmp.eq.s32.totalorder %s12, 0
    %p186 = por %p184, %p185
    %p187 = scmp.ne.s32.totalorder %s176, %s179
    %p188 = scmp.eq.s32.totalorder %s17, 1
    %p189 = por %p187, %p188
    %p190 = scmp.ne.s32.totalorder %s179, %s180
    %p191 = scmp.eq.s32.totalorder %s17, 0
    %p192 = por %p190, %p191
    %p193 = scmp.ne.s32.totalorder %s179, %s180
    %p194 = scmp.eq.s32.totalorder %s18, 1
    %p195 = por %p193, %p194
    %p197 = scmp.ne.s32.totalorder %s180, %s196
    %p198 = scmp.eq.s32.totalorder %s18, 0
    %p199 = por %p197, %p198
    %p200 = scmp.le.s32.totalorder 1, %s12
    %p201 = scmp.lt.s32.totalorder %s12, 3
    %p202 = pnand %p200, %p201
    %p203 = pneg %p202
    // Predicated region
    $region9: #{memory_p2p_loss_forward.3} parent=5 // pred_check
      _
    $region10: #{memory_p2p_loss_forward.3} parent=5 // pred_check_branch
      %205 = sbr.rel (%p202) target = $region12
    $region11: #{memory_p2p_loss_forward.3} parent=5 // pred_region
      %s206 = ssub.s32 %s12, 1
      // Predicated region
      $region13: #{memory_p2p_loss_forward.3} parent=11 // pred_check
        %p207 = pneg %p101
      $region14: #{memory_p2p_loss_forward.3} parent=11 // pred_check_branch
        %209 = sbr.rel (%p207) target = $region16
      $region15: #{memory_p2p_loss_forward.3} parent=11 // pred_region
        _
      $region16: #{memory_p2p_loss_forward.3} parent=11 // pred_fallthru
        _
      // Predicated region
      $region17: #{memory_p2p_loss_forward.3} parent=11 // pred_check
        %p210 = pneg %p122
      $region18: #{memory_p2p_loss_forward.3} parent=11 // pred_check_branch
        %212 = sbr.rel (%p210) target = $region20
      $region19: #{memory_p2p_loss_forward.3} parent=11 // pred_region
        _
      $region20: #{memory_p2p_loss_forward.3} parent=11 // pred_fallthru
        _
      // Predicated region
      $region21: #{memory_p2p_loss_forward.3} parent=11 // pred_check
        %p213 = pneg %p143
      $region22: #{memory_p2p_loss_forward.3} parent=11 // pred_check_branch
        %215 = sbr.rel (%p213) target = $region24
      $region23: #{memory_p2p_loss_forward.3} parent=11 // pred_region
        _
      $region24: #{memory_p2p_loss_forward.3} parent=11 // pred_fallthru
        _
      // Predicated region
      $region25: #{memory_p2p_loss_forward.3} parent=11 // pred_check
        %p216 = pneg %p164
      $region26: #{memory_p2p_loss_forward.3} parent=11 // pred_check_branch
        %218 = sbr.rel (%p216) target = $region28
      $region27: #{memory_p2p_loss_forward.3} parent=11 // pred_region
        _
      $region28: #{memory_p2p_loss_forward.3} parent=11 // pred_fallthru
        _
    $region12: #{memory_p2p_loss_forward.3} parent=5 // pred_fallthru
      _
    %p219 = scmp.lt.s32.totalorder %s12, 2
    // Predicated region
    $region29: #{memory_p2p_loss_forward.3} parent=5 // pred_check
      %p220 = pneg %p219
    $region30: #{memory_p2p_loss_forward.3} parent=5 // pred_check_branch
      %222 = sbr.rel (%p220) target = $region32
    $region31: #{memory_p2p_loss_forward.3} parent=5 // pred_region
      // Predicated region
      $region33: #{memory_p2p_loss_forward.3} parent=31 // pred_check
        %p223 = pneg %p46
      $region34: #{memory_p2p_loss_forward.3} parent=31 // pred_check_branch
        %225 = sbr.rel (%p223) target = $region36
      $region35: #{memory_p2p_loss_forward.3} parent=31 // pred_region
        %s226 = smul.u32 2, %s20
        %p227 = scmp.lt.s32.totalorder %s19, 1
        %s228 = scalar_select %p227, %s19, 1
        %p229 = scmp.lt.s32.totalorder %s226, 1
        %s230 = scalar_select %p229, %s226, 1
        %s231 = smul.addr %s228, 4
        %s232 = sadd.s32 %s230, %s231
        %s233 = smul.addr %s232, 8
        %s234 = scalar_lea.vmem %s0, %s233
        %s235 = smul.u32 2, %s20
      $region36: #{memory_p2p_loss_forward.3} parent=31 // pred_fallthru
        _
      // Predicated region
      $region37: #{memory_p2p_loss_forward.3} parent=31 // pred_check
        %p236 = pneg %p74
      $region38: #{memory_p2p_loss_forward.3} parent=31 // pred_check_branch
        %238 = sbr.rel (%p236) target = $region40
      $region39: #{memory_p2p_loss_forward.3} parent=31 // pred_region
        %s239 = smul.u32 2, %s20
        %p240 = scmp.lt.s32.totalorder %s19, 1
        %s241 = scalar_select %p240, %s19, 1
        %p242 = scmp.lt.s32.totalorder %s239, 1
        %s243 = scalar_select %p242, %s239, 1
        %s244 = smul.addr %s241, 8
        %s245 = sadd.s32 %s243, %s244
        %s246 = smul.addr %s245, 8
        %s247 = scalar_lea.vmem %s1, %s246
        %s248 = smul.u32 2, %s20
      $region40: #{memory_p2p_loss_forward.3} parent=31 // pred_fallthru
        _
    $region32: #{memory_p2p_loss_forward.3} parent=5 // pred_fallthru
      _
    %p249 = scmp.le.s32.totalorder 1, %s12
    %p250 = scmp.lt.s32.totalorder %s12, 3
    %p251 = pnand %p249, %p250
    %p252 = pneg %p251
    // Predicated region
    $region41: #{memory_p2p_loss_forward.3} parent=5 // pred_check
      _
    $region42: #{memory_p2p_loss_forward.3} parent=5 // pred_check_branch
      %254 = sbr.rel (%p251) target = $region44
    $region43: #{memory_p2p_loss_forward.3} parent=5 // pred_region
      %s255 = ssub.s32 %s12, 1
      %s256 = smul.u32 2, %s22
      %p257 = scmp.lt.s32.totalorder %s21, 1
      %s258 = scalar_select %p257, %s21, 1
      %p259 = scmp.lt.s32.totalorder %s256, 1
      %s260 = scalar_select %p259, %s256, 1
      %s261 = smul.addr %s258, 4
      %s262 = sadd.s32 %s260, %s261
      %s263 = smul.addr %s262, 8
      %s264 = scalar_lea.vmem %s0, %s263
      %p265 = pneg %p52
      %p266 = pneg %p49
      %s267 = smul.u32 2, %s22
      %p268 = scmp.lt.s32.totalorder %s21, 1
      %s269 = scalar_select %p268, %s21, 1
      %p270 = scmp.lt.s32.totalorder %s267, 1
      %s271 = scalar_select %p270, %s267, 1
      %s272 = smul.addr %s269, 8
      %s273 = sadd.s32 %s271, %s272
      %s274 = smul.addr %s273, 8
      %s275 = scalar_lea.vmem %s1, %s274
      %p276 = pneg %p80
      %p277 = pneg %p77
      %p278 = pneg %p101
      %p279 = pneg %p98
      %p280 = pneg %p122
      %p281 = pneg %p119
      %p282 = pneg %p143
      %p283 = pneg %p140
      %p284 = pneg %p164
      %p285 = pneg %p161
      %p286 = pneg %p192
      %p287 = pneg %p189
      %p288 = scmp.lt.s32.totalorder %s21, 1
      %s289 = scalar_select %p288, %s21, 1
      %p290 = scmp.lt.s32.totalorder %s22, 0
      %s291 = scalar_select %p290, %s22, 0
      %s292 = smul.addr %s291, 2
      %s293 = smul.addr %s289, 2
      %s294 = sadd.s32 %s292, %s293
      %s295 = scalar_lea.vmem %s6, %s294
      %s296 = smul.u32 2, %s22
      %p297 = scmp.lt.s32.totalorder %s21, 1
      %s298 = scalar_select %p297, %s21, 1
      %p299 = scmp.lt.s32.totalorder %s296, 1
      %s300 = scalar_select %p299, %s296, 1
      %s301 = smul.addr %s298, 4
      %s302 = sadd.s32 %s300, %s301
      %s303 = smul.addr %s302, 8
      %s304 = scalar_lea.vmem %s0, %s303
      %s305 = smul.u32 2, %s22
      %s306 = smul.u32 2, %s22
      %p307 = scmp.lt.s32.totalorder %s21, 1
      %s308 = scalar_select %p307, %s21, 1
      %p309 = scmp.lt.s32.totalorder %s306, 1
      %s310 = scalar_select %p309, %s306, 1
      %s311 = smul.addr %s308, 8
      %s312 = sadd.s32 %s310, %s311
      %s313 = smul.addr %s312, 8
      %s314 = scalar_lea.vmem %s1, %s313
      %s315 = smul.u32 2, %s22
      %p316 = scmp.lt.s32.totalorder %s21, 1
      %s317 = scalar_select %p316, %s21, 1
      %p318 = scmp.lt.s32.totalorder %s22, 0
      %s319 = scalar_select %p318, %s22, 0
      %s320 = smul.addr %s319, 2
      %s321 = smul.addr %s317, 2
      %s322 = sadd.s32 %s320, %s321
      %s323 = scalar_lea.vmem %s6, %s322
      %v325 = vld [vmem:[%s304] sm:$0xff]
      %v326 = vld [vmem:[%s304 + $0x8] sm:$0xff]
      %v327 = vld [vmem:[%s304 + $0x10] sm:$0xff]
      %v328 = vld [vmem:[%s304 + $0x18] sm:$0xff]
      %v329 = vpack.c.bf16 %v327, %v325
      %v330 = vpack.c.bf16 %v328, %v326
      %v331 = vld [vmem:[%s2] sm:$0xf]
      %v332 = vld [vmem:[%s2 + $0x4] sm:$0xf]
      %v333 = vld [vmem:[%s2 + $0x8] sm:$0xf]
      %v334 = vld [vmem:[%s2 + $0xc] sm:$0xf]
      %v335 = vld [vmem:[%s3] sm:$0xff]
      %v336 = vld [vmem:[%s3 + $0x8] sm:$0xff]
      %v337 = vld [vmem:[%s3 + $0x10] sm:$0xff]
      %v338 = vld [vmem:[%s3 + $0x18] sm:$0xff]
      %340 = vset.pattern.permute.xlu0 0
      %341 = vperm.xlu0 %340, %v335
      %v342 = vpop.permute.xlu0 %341
      %345 = vset.pattern.permute.xlu0 0
      %346 = vperm.xlu0 %345, %v336
      %v347 = vpop.permute.xlu0 %346
      %350 = vset.pattern.permute.xlu0 0
      %351 = vperm.xlu0 %350, %v337
      %v352 = vpop.permute.xlu0 %351
      %355 = vset.pattern.permute.xlu0 0
      %356 = vperm.xlu0 %355, %v338
      %v357 = vpop.permute.xlu0 %356
      %v363 = vunpack.c.l.b16 %v331
      %v364 = vunpack.c.l.b16 %v332
      %v365 = vunpack.c.l.b16 %v333
      %v366 = vunpack.c.l.b16 %v334
      %v367 = vpack.c.b16 %v364, %v363
      %v368 = vpack.c.b16 %v366, %v365
      %vm369 = vcmask 130048
      %v371 = vsel %vm369, %v367, 0
      %v374 = vsel %vm369, %v368, 0
      %376 = vmatprep.subr.bf16.mxu0 %v330
      %377 = vmatpush1.bf16.msra.mxu0 %v329
      %378 = vmatprep.subr.bf16.mxu0 0
      %379 = vmatpush1.bf16.msra.mxu0 0
      %380 = vmatprep.subr.bf16.mxu0 0
      %381 = vmatpush1.bf16.msra.mxu0 0
      %382 = vmatprep.subr.bf16.mxu0 0
      %383 = vmatpush1.bf16.msra.mxu0 0
      %384 = vmatprep.subr.bf16.mxu0 0
      %385 = vmatpush1.bf16.msra.mxu0 0
      %386 = vmatprep.subr.bf16.mxu0 0
      %387 = vmatpush1.bf16.msra.mxu0 0
      %388 = vmatprep.subr.bf16.mxu0 0
      %389 = vmatpush1.bf16.msra.mxu0 0
      %390 = vmatprep.subr.bf16.mxu0 0
      %391 = vmatpush1.bf16.msra.mxu0 0
      %392 = vmatprep.subr.bf16.mxu0 0
      %393 = vmatpush1.bf16.msra.mxu0 0
      %394 = vmatprep.subr.bf16.mxu0 0
      %395 = vmatpush1.bf16.msra.mxu0 0
      %396 = vmatprep.subr.bf16.mxu0 0
      %397 = vmatpush1.bf16.msra.mxu0 0
      %398 = vmatprep.subr.bf16.mxu0 0
      %399 = vmatpush1.bf16.msra.mxu0 0
      %400 = vmatprep.subr.bf16.mxu0 0
      %401 = vmatpush1.bf16.msra.mxu0 0
      %402 = vmatprep.subr.bf16.mxu0 0
      %403 = vmatpush1.bf16.msra.mxu0 0
      %404 = vmatprep.subr.bf16.mxu0 0
      %405 = vmatpush1.bf16.msra.mxu0 0
      %406 = vmatprep.subr.bf16.mxu0 0
      %407 = vmatpush1.bf16.msra.mxu0 0
      %408 = vmatprep.mubr.bf16.mxu0 0
      %409 = vmatmul.mubr.bf16.gmra.mrb[0].mxu0 %v371
      %v410 = vpop.f32.mrb[0].mxu0
      %v411 = vadd.f32 %v342, %v410
      %v412 = vpop.f32.mrb[0].mxu0
      %v413 = vadd.f32 %v342, %v412
      %v414 = vpop.f32.mrb[0].mxu0
      %v415 = vadd.f32 %v347, %v414
      %v416 = vpop.f32.mrb[0].mxu0
      %v417 = vadd.f32 %v347, %v416
      %418 = vmatprep.mubr.bf16.mxu0 0
      %419 = vmatmul.mubr.bf16.gmra.mrb[0].mxu0 %v374
      %v420 = vpop.f32.mrb[0].mxu0
      %v421 = vadd.f32 %v352, %v420
      %v422 = vpop.f32.mrb[0].mxu0
      %v423 = vadd.f32 %v352, %v422
      %v424 = vpop.f32.mrb[0].mxu0
      %v425 = vadd.f32 %v357, %v424
      %v426 = vpop.f32.mrb[0].mxu0
      %v427 = vadd.f32 %v357, %v426
      %428 = vdwg.mxu0
      %v429 = vmax.f32 %v411, 0.0
      %v430 = vmax.f32 %v413, 0.0
      %v431 = vmax.f32 %v415, 0.0
      %v432 = vmax.f32 %v417, 0.0
      %v433 = vmax.f32 %v421, 0.0
      %v434 = vmax.f32 %v423, 0.0
      %v435 = vmax.f32 %v425, 0.0
      %v436 = vmax.f32 %v427, 0.0
      %v437 = vld [vmem:[%s4] sm:$0xf]
      %v438 = vld [vmem:[%s4 + $0x4] sm:$0xf]
      %v439 = vld [vmem:[%s4 + $0x8] sm:$0xf]
      %v440 = vld [vmem:[%s4 + $0xc] sm:$0xf]
      %v441 = vpack.c.bf16 %v431, %v429
      %v442 = vpack.c.bf16 %v432, %v430
      %v443 = vpack.c.bf16 %v435, %v433
      %v444 = vpack.c.bf16 %v436, %v434
      %v449 = vunpack.c.l.b16 %v437
      %v450 = vunpack.c.l.b16 %v438
      %v451 = vunpack.c.l.b16 %v439
      %v452 = vunpack.c.l.b16 %v440
      %v453 = vpack.c.b16 %v450, %v449
      %v454 = vpack.c.b16 %v452, %v451
      %vm455 = vcmask 261120
      %v457 = vsel %vm455, %v453, 0
      %v460 = vsel %vm455, %v454, 0
      %462 = vmatprep.subr.bf16.mxu0 %v442
      %463 = vmatpush1.bf16.msra.mxu0 %v441
      %464 = vmatprep.subr.bf16.mxu0 %v444
      %465 = vmatpush1.bf16.msra.mxu0 %v443
      %466 = vmatprep.subr.bf16.mxu0 0
      %467 = vmatpush1.bf16.msra.mxu0 0
      %468 = vmatprep.subr.bf16.mxu0 0
      %469 = vmatpush1.bf16.msra.mxu0 0
      %470 = vmatprep.subr.bf16.mxu0 0
      %471 = vmatpush1.bf16.msra.mxu0 0
      %472 = vmatprep.subr.bf16.mxu0 0
      %473 = vmatpush1.bf16.msra.mxu0 0
      %474 = vmatprep.subr.bf16.mxu0 0
      %475 = vmatpush1.bf16.msra.mxu0 0
      %476 = vmatprep.subr.bf16.mxu0 0
      %477 = vmatpush1.bf16.msra.mxu0 0
      %478 = vmatprep.subr.bf16.mxu0 0
      %479 = vmatpush1.bf16.msra.mxu0 0
      %480 = vmatprep.subr.bf16.mxu0 0
      %481 = vmatpush1.bf16.msra.mxu0 0
      %482 = vmatprep.subr.bf16.mxu0 0
      %483 = vmatpush1.bf16.msra.mxu0 0
      %484 = vmatprep.subr.bf16.mxu0 0
      %485 = vmatpush1.bf16.msra.mxu0 0
      %486 = vmatprep.subr.bf16.mxu0 0
      %487 = vmatpush1.bf16.msra.mxu0 0
      %488 = vmatprep.subr.bf16.mxu0 0
      %489 = vmatpush1.bf16.msra.mxu0 0
      %490 = vmatprep.subr.bf16.mxu0 0
      %491 = vmatpush1.bf16.msra.mxu0 0
      %492 = vmatprep.subr.bf16.mxu0 0
      %493 = vmatpush1.bf16.msra.mxu0 0
      %494 = vmatprep.mubr.bf16.mxu0 0
      %495 = vmatmul.mubr.bf16.gmra.mrb[0].mxu0 %v457
      %v496 = vpop.f32.mrb[0].mxu0
      %v497 = vadd.f32 0.0, %v496
      %v498 = vpop.f32.mrb[0].mxu0
      %v499 = vadd.f32 0.0, %v498
      %v500 = vpop.f32.mrb[0].mxu0
      %v501 = vadd.f32 0.0, %v500
      %v502 = vpop.f32.mrb[0].mxu0
      %v503 = vadd.f32 0.0, %v502
      %504 = vmatprep.mubr.bf16.mxu0 0
      %505 = vmatmul.mubr.bf16.gmra.mrb[0].mxu0 %v460
      %v506 = vpop.f32.mrb[0].mxu0
      %v507 = vadd.f32 0.0, %v506
      %v508 = vpop.f32.mrb[0].mxu0
      %v509 = vadd.f32 0.0, %v508
      %v510 = vpop.f32.mrb[0].mxu0
      %v511 = vadd.f32 0.0, %v510
      %v512 = vpop.f32.mrb[0].mxu0
      %v513 = vadd.f32 0.0, %v512
      %514 = vdwg.mxu0
      %v515 = vmul.f32 %v497, %v497
      %v516 = vmul.f32 %v499, %v499
      %v517 = vmul.f32 %v501, %v501
      %v518 = vmul.f32 %v503, %v503
      %v519 = vmul.f32 %v507, %v507
      %v520 = vmul.f32 %v509, %v509
      %v521 = vmul.f32 %v511, %v511
      %v522 = vmul.f32 %v513, %v513
      %v523 = vadd.f32 %v515, %v517
      %v524 = vadd.f32 %v523, %v519
      %v525 = vadd.f32 %v524, %v521
      %v526 = vrot.slane %v525, 4
      %v527 = vadd.f32 %v525, %v526
      %v528 = vrot.slane %v527, 2
      %v529 = vadd.f32 %v527, %v528
      %v530 = vrot.slane %v529, 1
      %v531 = vadd.f32 %v529, %v530
      %v532 = vadd.f32 %v516, %v518
      %v533 = vadd.f32 %v532, %v520
      %v534 = vadd.f32 %v533, %v522
      %v535 = vrot.slane %v534, 4
      %v536 = vadd.f32 %v534, %v535
      %v537 = vrot.slane %v536, 2
      %v538 = vadd.f32 %v536, %v537
      %v539 = vrot.slane %v538, 1
      %v540 = vadd.f32 %v538, %v539
      %v541 = vmax.f32 %v531, 1e-24
      %v542 = vmax.f32 %v540, 1e-24
      %v543 = vrsqrt.pop %v541
      %v544 = vrsqrt.pop %v542
      %v545 = vld [vmem:[%s314] sm:$0xff]
      %v546 = vld [vmem:[%s314 + $0x8] sm:$0xff]
      %v547 = vld [vmem:[%s314 + $0x10] sm:$0xff]
      %v548 = vld [vmem:[%s314 + $0x18] sm:$0xff]
      %v549 = vld [vmem:[%s314 + $0x20] sm:$0xff]
      %v550 = vld [vmem:[%s314 + $0x28] sm:$0xff]
      %v551 = vld [vmem:[%s314 + $0x30] sm:$0xff]
      %v552 = vld [vmem:[%s314 + $0x38] sm:$0xff]
      %v553 = vmul.f32 %v545, %v545
      %v554 = vmul.f32 %v546, %v546
      %v555 = vmul.f32 %v547, %v547
      %v556 = vmul.f32 %v548, %v548
      %v557 = vmul.f32 %v549, %v549
      %v558 = vmul.f32 %v550, %v550
      %v559 = vmul.f32 %v551, %v551
      %v560 = vmul.f32 %v552, %v552
      %v561 = vadd.f32 %v553, %v555
      %v562 = vadd.f32 %v561, %v557
      %v563 = vadd.f32 %v562, %v559
      %v564 = vrot.slane %v563, 4
      %v565 = vadd.f32 %v563, %v564
      %v566 = vrot.slane %v565, 2
      %v567 = vadd.f32 %v565, %v566
      %v568 = vrot.slane %v567, 1
      %v569 = vadd.f32 %v567, %v568
      %v570 = vadd.f32 %v554, %v556
      %v571 = vadd.f32 %v570, %v558
      %v572 = vadd.f32 %v571, %v560
      %v573 = vrot.slane %v572, 4
      %v574 = vadd.f32 %v572, %v573
      %v575 = vrot.slane %v574, 2
      %v576 = vadd.f32 %v574, %v575
      %v577 = vrot.slane %v576, 1
      %v578 = vadd.f32 %v576, %v577
      %v579 = vmax.f32 %v569, 1e-24
      %v580 = vmax.f32 %v578, 1e-24
      %v581 = vrsqrt.pop %v579
      %v582 = vrsqrt.pop %v580
      %v583 = vld [vmem:[%s5] sm:$0xf]
      %v584 = vld [vmem:[%s5 + $0x4] sm:$0xf]
      %v585 = vld [vmem:[%s5 + $0x8] sm:$0xf]
      %v586 = vld [vmem:[%s5 + $0xc] sm:$0xf]
      %v587 = vld [vmem:[%s5 + $0x10] sm:$0xf]
      %v588 = vld [vmem:[%s5 + $0x14] sm:$0xf]
      %v589 = vld [vmem:[%s5 + $0x18] sm:$0xf]
      %v590 = vld [vmem:[%s5 + $0x1c] sm:$0xf]
      %v591 = vld [vmem:[%s5 + $0x20] sm:$0xf]
      %v592 = vld [vmem:[%s5 + $0x24] sm:$0xf]
      %v593 = vld [vmem:[%s5 + $0x28] sm:$0xf]
      %v594 = vld [vmem:[%s5 + $0x2c] sm:$0xf]
      %v595 = vld [vmem:[%s5 + $0x30] sm:$0xf]
      %v596 = vld [vmem:[%s5 + $0x34] sm:$0xf]
      %v597 = vld [vmem:[%s5 + $0x38] sm:$0xf]
      %v598 = vld [vmem:[%s5 + $0x3c] sm:$0xf]
      %v599 = vpack.c.bf16 %v547, %v545
      %v600 = vpack.c.bf16 %v548, %v546
      %v601 = vpack.c.bf16 %v551, %v549
      %v602 = vpack.c.bf16 %v552, %v550
      %v619 = vunpack.c.l.b16 %v583
      %v620 = vunpack.c.l.b16 %v584
      %v621 = vunpack.c.l.b16 %v585
      %v622 = vunpack.c.l.b16 %v586
      %v623 = vunpack.c.l.b16 %v587
      %v624 = vunpack.c.l.b16 %v588
      %v625 = vunpack.c.l.b16 %v589
      %v626 = vunpack.c.l.b16 %v590
      %v627 = vunpack.c.l.b16 %v591
      %v628 = vunpack.c.l.b16 %v592
      %v629 = vunpack.c.l.b16 %v593
      %v630 = vunpack.c.l.b16 %v594
      %v631 = vunpack.c.l.b16 %v595
      %v632 = vunpack.c.l.b16 %v596
      %v633 = vunpack.c.l.b16 %v597
      %v634 = vunpack.c.l.b16 %v598
      %v635 = vpack.c.b16 %v620, %v619
      %v636 = vpack.c.b16 %v622, %v621
      %v637 = vpack.c.b16 %v624, %v623
      %v638 = vpack.c.b16 %v626, %v625
      %v639 = vpack.c.b16 %v628, %v627
      %v640 = vpack.c.b16 %v630, %v629
      %v641 = vpack.c.b16 %v632, %v631
      %v642 = vpack.c.b16 %v634, %v633
      %v644 = vsel %vm455, %v635, 0
      %v647 = vsel %vm455, %v636, 0
      %v650 = vsel %vm455, %v637, 0
      %v653 = vsel %vm455, %v638, 0
      %v656 = vsel %vm455, %v639, 0
      %v659 = vsel %vm455, %v640, 0
      %v662 = vsel %vm455, %v641, 0
      %v665 = vsel %vm455, %v642, 0
      %667 = vmatprep.subr.bf16.mxu0 %v600
      %668 = vmatpush1.bf16.msra.mxu0 %v599
      %669 = vmatprep.subr.bf16.mxu0 %v602
      %670 = vmatpush1.bf16.msra.mxu0 %v601
      %671 = vmatprep.subr.bf16.mxu0 0
      %672 = vmatpush1.bf16.msra.mxu0 0
      %673 = vmatprep.subr.bf16.mxu0 0
      %674 = vmatpush1.bf16.msra.mxu0 0
      %675 = vmatprep.subr.bf16.mxu0 0
      %676 = vmatpush1.bf16.msra.mxu0 0
      %677 = vmatprep.subr.bf16.mxu0 0
      %678 = vmatpush1.bf16.msra.mxu0 0
      %679 = vmatprep.subr.bf16.mxu0 0
      %680 = vmatpush1.bf16.msra.mxu0 0
      %681 = vmatprep.subr.bf16.mxu0 0
      %682 = vmatpush1.bf16.msra.mxu0 0
      %683 = vmatprep.subr.bf16.mxu0 0
      %684 = vmatpush1.bf16.msra.mxu0 0
      %685 = vmatprep.subr.bf16.mxu0 0
      %686 = vmatpush1.bf16.msra.mxu0 0
      %687 = vmatprep.subr.bf16.mxu0 0
      %688 = vmatpush1.bf16.msra.mxu0 0
      %689 = vmatprep.subr.bf16.mxu0 0
      %690 = vmatpush1.bf16.msra.mxu0 0
      %691 = vmatprep.subr.bf16.mxu0 0
      %692 = vmatpush1.bf16.msra.mxu0 0
      %693 = vmatprep.subr.bf16.mxu0 0
      %694 = vmatpush1.bf16.msra.mxu0 0
      %695 = vmatprep.subr.bf16.mxu0 0
      %696 = vmatpush1.bf16.msra.mxu0 0
      %697 = vmatprep.subr.bf16.mxu0 0
      %698 = vmatpush1.bf16.msra.mxu0 0
      %699 = vmatprep.mubr.bf16.mxu0 0
      %700 = vmatmul.mubr.bf16.gmra.mrb[0].mxu0 %v644
      %v701 = vpop.f32.mrb[0].mxu0
      %v702 = vadd.f32 0.0, %v701
      %v703 = vpop.f32.mrb[0].mxu0
      %v704 = vadd.f32 0.0, %v703
      %v705 = vpop.f32.mrb[0].mxu0
      %v706 = vadd.f32 0.0, %v705
      %v707 = vpop.f32.mrb[0].mxu0
      %v708 = vadd.f32 0.0, %v707
      %709 = vmatprep.mubr.bf16.mxu0 0
      %710 = vmatmul.mubr.bf16.gmra.mrb[0].mxu0 %v647
      %v711 = vpop.f32.mrb[0].mxu0
      %v712 = vadd.f32 0.0, %v711
      %v713 = vpop.f32.mrb[0].mxu0
      %v714 = vadd.f32 0.0, %v713
      %v715 = vpop.f32.mrb[0].mxu0
      %v716 = vadd.f32 0.0, %v715
      %v717 = vpop.f32.mrb[0].mxu0
      %v718 = vadd.f32 0.0, %v717
      %719 = vmatprep.mubr.bf16.mxu0 0
      %720 = vmatmul.mubr.bf16.gmra.mrb[0].mxu0 %v650
      %v721 = vpop.f32.mrb[0].mxu0
      %v722 = vadd.f32 0.0, %v721
      %v723 = vpop.f32.mrb[0].mxu0
      %v724 = vadd.f32 0.0, %v723
      %v725 = vpop.f32.mrb[0].mxu0
      %v726 = vadd.f32 0.0, %v725
      %v727 = vpop.f32.mrb[0].mxu0
      %v728 = vadd.f32 0.0, %v727
      %729 = vmatprep.mubr.bf16.mxu0 0
      %730 = vmatmul.mubr.bf16.gmra.mrb[0].mxu0 %v653
      %v731 = vpop.f32.mrb[0].mxu0
      %v732 = vadd.f32 0.0, %v731
      %v733 = vpop.f32.mrb[0].mxu0
      %v734 = vadd.f32 0.0, %v733
      %v735 = vpop.f32.mrb[0].mxu0
      %v736 = vadd.f32 0.0, %v735
      %v737 = vpop.f32.mrb[0].mxu0
      %v738 = vadd.f32 0.0, %v737
      %739 = vmatprep.mubr.bf16.mxu0 0
      %740 = vmatmul.mubr.bf16.gmra.mrb[0].mxu0 %v656
      %v741 = vpop.f32.mrb[0].mxu0
      %v742 = vadd.f32 0.0, %v741
      %v743 = vpop.f32.mrb[0].mxu0
      %v744 = vadd.f32 0.0, %v743
      %v745 = vpop.f32.mrb[0].mxu0
      %v746 = vadd.f32 0.0, %v745
      %v747 = vpop.f32.mrb[0].mxu0
      %v748 = vadd.f32 0.0, %v747
      %749 = vmatprep.mubr.bf16.mxu0 0
      %750 = vmatmul.mubr.bf16.gmra.mrb[0].mxu0 %v659
      %v751 = vpop.f32.mrb[0].mxu0
      %v752 = vadd.f32 0.0, %v751
      %v753 = vpop.f32.mrb[0].mxu0
      %v754 = vadd.f32 0.0, %v753
      %v755 = vpop.f32.mrb[0].mxu0
      %v756 = vadd.f32 0.0, %v755
      %v757 = vpop.f32.mrb[0].mxu0
      %v758 = vadd.f32 0.0, %v757
      %759 = vmatprep.mubr.bf16.mxu0 0
      %760 = vmatmul.mubr.bf16.gmra.mrb[0].mxu0 %v662
      %v761 = vpop.f32.mrb[0].mxu0
      %v762 = vadd.f32 0.0, %v761
      %v763 = vpop.f32.mrb[0].mxu0
      %v764 = vadd.f32 0.0, %v763
      %v765 = vpop.f32.mrb[0].mxu0
      %v766 = vadd.f32 0.0, %v765
      %v767 = vpop.f32.mrb[0].mxu0
      %v768 = vadd.f32 0.0, %v767
      %769 = vmatprep.mubr.bf16.mxu0 0
      %770 = vmatmul.mubr.bf16.gmra.mrb[0].mxu0 %v665
      %v771 = vpop.f32.mrb[0].mxu0
      %v772 = vadd.f32 0.0, %v771
      %v773 = vpop.f32.mrb[0].mxu0
      %v774 = vadd.f32 0.0, %v773
      %v775 = vpop.f32.mrb[0].mxu0
      %v776 = vadd.f32 0.0, %v775
      %v777 = vpop.f32.mrb[0].mxu0
      %v778 = vadd.f32 0.0, %v777
      %779 = vdwg.mxu0
      %v780 = vmul.f32 %v581, 10.0
      %v781 = vmul.f32 %v582, 10.0
      %v782 = vmul.f32 %v702, %v780
      %v783 = vmul.f32 %v704, %v781
      %v784 = vmul.f32 %v706, %v780
      %v785 = vmul.f32 %v708, %v781
      %v786 = vmul.f32 %v712, %v780
      %v787 = vmul.f32 %v714, %v781
      %v788 = vmul.f32 %v716, %v780
      %v789 = vmul.f32 %v718, %v781
      %v790 = vmul.f32 %v722, %v780
      %v791 = vmul.f32 %v724, %v781
      %v792 = vmul.f32 %v726, %v780
      %v793 = vmul.f32 %v728, %v781
      %v794 = vmul.f32 %v732, %v780
      %v795 = vmul.f32 %v734, %v781
      %v796 = vmul.f32 %v736, %v780
      %v797 = vmul.f32 %v738, %v781
      %v798 = vmul.f32 %v742, %v780
      %v799 = vmul.f32 %v744, %v781
      %v800 = vmul.f32 %v746, %v780
      %v801 = vmul.f32 %v748, %v781
      %v802 = vmul.f32 %v752, %v780
      %v803 = vmul.f32 %v754, %v781
      %v804 = vmul.f32 %v756, %v780
      %v805 = vmul.f32 %v758, %v781
      %v806 = vmul.f32 %v762, %v780
      %v807 = vmul.f32 %v764, %v781
      %v808 = vmul.f32 %v766, %v780
      %v809 = vmul.f32 %v768, %v781
      %v810 = vmul.f32 %v772, %v780
      %v811 = vmul.f32 %v774, %v781
      %v812 = vmul.f32 %v776, %v780
      %v813 = vmul.f32 %v778, %v781
      %v814 = vpack.c.bf16 %v501, %v497
      %v815 = vpack.c.bf16 %v503, %v499
      %v816 = vpack.c.bf16 %v511, %v507
      %v817 = vpack.c.bf16 %v513, %v509
      %818 = vmatprep.subr.bf16.mxu0 %v815
      %819 = vmatpush1.bf16.msra.mxu0 %v814
      %820 = vmatprep.subr.bf16.mxu0 %v817
      %821 = vmatpush1.bf16.msra.mxu0 %v816
      %822 = vmatprep.subr.bf16.mxu0 0
      %823 = vmatpush1.bf16.msra.mxu0 0
      %824 = vmatprep.subr.bf16.mxu0 0
      %825 = vmatpush1.bf16.msra.mxu0 0
      %826 = vmatprep.subr.bf16.mxu0 0
      %827 = vmatpush1.bf16.msra.mxu0 0
      %828 = vmatprep.subr.bf16.mxu0 0
      %829 = vmatpush1.bf16.msra.mxu0 0
      %830 = vmatprep.subr.bf16.mxu0 0
      %831 = vmatpush1.bf16.msra.mxu0 0
      %832 = vmatprep.subr.bf16.mxu0 0
      %833 = vmatpush1.bf16.msra.mxu0 0
      %834 = vmatprep.subr.bf16.mxu0 0
      %835 = vmatpush1.bf16.msra.mxu0 0
      %836 = vmatprep.subr.bf16.mxu0 0
      %837 = vmatpush1.bf16.msra.mxu0 0
      %838 = vmatprep.subr.bf16.mxu0 0
      %839 = vmatpush1.bf16.msra.mxu0 0
      %840 = vmatprep.subr.bf16.mxu0 0
      %841 = vmatpush1.bf16.msra.mxu0 0
      %842 = vmatprep.subr.bf16.mxu0 0
      %843 = vmatpush1.bf16.msra.mxu0 0
      %844 = vmatprep.subr.bf16.mxu0 0
      %845 = vmatpush1.bf16.msra.mxu0 0
      %846 = vmatprep.subr.bf16.mxu0 0
      %847 = vmatpush1.bf16.msra.mxu0 0
      %848 = vmatprep.subr.bf16.mxu0 0
      %849 = vmatpush1.bf16.msra.mxu0 0
      %850 = vmatprep.mubr.bf16.mxu0 0
      %851 = vmatmul.mubr.bf16.gmra.mrb[0].mxu0 %v644
      %v852 = vpop.f32.mrb[0].mxu0
      %v853 = vadd.f32 0.0, %v852
      %v854 = vpop.f32.mrb[0].mxu0
      %v855 = vadd.f32 0.0, %v854
      %v856 = vpop.f32.mrb[0].mxu0
      %v857 = vadd.f32 0.0, %v856
      %v858 = vpop.f32.mrb[0].mxu0
      %v859 = vadd.f32 0.0, %v858
      %860 = vmatprep.mubr.bf16.mxu0 0
      %861 = vmatmul.mubr.bf16.gmra.mrb[0].mxu0 %v647
      %v862 = vpop.f32.mrb[0].mxu0
      %v863 = vadd.f32 0.0, %v862
      %v864 = vpop.f32.mrb[0].mxu0
      %v865 = vadd.f32 0.0, %v864
      %v866 = vpop.f32.mrb[0].mxu0
      %v867 = vadd.f32 0.0, %v866
      %v868 = vpop.f32.mrb[0].mxu0
      %v869 = vadd.f32 0.0, %v868
      %870 = vmatprep.mubr.bf16.mxu0 0
      %871 = vmatmul.mubr.bf16.gmra.mrb[0].mxu0 %v650
      %v872 = vpop.f32.mrb[0].mxu0
      %v873 = vadd.f32 0.0, %v872
      %v874 = vpop.f32.mrb[0].mxu0
      %v875 = vadd.f32 0.0, %v874
      %v876 = vpop.f32.mrb[0].mxu0
      %v877 = vadd.f32 0.0, %v876
      %v878 = vpop.f32.mrb[0].mxu0
      %v879 = vadd.f32 0.0, %v878
      %880 = vmatprep.mubr.bf16.mxu0 0
      %881 = vmatmul.mubr.bf16.gmra.mrb[0].mxu0 %v653
      %v882 = vpop.f32.mrb[0].mxu0
      %v883 = vadd.f32 0.0, %v882
      %v884 = vpop.f32.mrb[0].mxu0
      %v885 = vadd.f32 0.0, %v884
      %v886 = vpop.f32.mrb[0].mxu0
      %v887 = vadd.f32 0.0, %v886
      %v888 = vpop.f32.mrb[0].mxu0
      %v889 = vadd.f32 0.0, %v888
      %890 = vmatprep.mubr.bf16.mxu0 0
      %891 = vmatmul.mubr.bf16.gmra.mrb[0].mxu0 %v656
      %v892 = vpop.f32.mrb[0].mxu0
      %v893 = vadd.f32 0.0, %v892
      %v894 = vpop.f32.mrb[0].mxu0
      %v895 = vadd.f32 0.0, %v894
      %v896 = vpop.f32.mrb[0].mxu0
      %v897 = vadd.f32 0.0, %v896
      %v898 = vpop.f32.mrb[0].mxu0
      %v899 = vadd.f32 0.0, %v898
      %900 = vmatprep.mubr.bf16.mxu0 0
      %901 = vmatmul.mubr.bf16.gmra.mrb[0].mxu0 %v659
      %v902 = vpop.f32.mrb[0].mxu0
      %v903 = vadd.f32 0.0, %v902
      %v904 = vpop.f32.mrb[0].mxu0
      %v905 = vadd.f32 0.0, %v904
      %v906 = vpop.f32.mrb[0].mxu0
      %v907 = vadd.f32 0.0, %v906
      %v908 = vpop.f32.mrb[0].mxu0
      %v909 = vadd.f32 0.0, %v908
      %910 = vmatprep.mubr.bf16.mxu0 0
      %911 = vmatmul.mubr.bf16.gmra.mrb[0].mxu0 %v662
      %v912 = vpop.f32.mrb[0].mxu0
      %v913 = vadd.f32 0.0, %v912
      %v914 = vpop.f32.mrb[0].mxu0
      %v915 = vadd.f32 0.0, %v914
      %v916 = vpop.f32.mrb[0].mxu0
      %v917 = vadd.f32 0.0, %v916
      %v918 = vpop.f32.mrb[0].mxu0
      %v919 = vadd.f32 0.0, %v918
      %920 = vmatprep.mubr.bf16.mxu0 0
      %921 = vmatmul.mubr.bf16.gmra.mrb[0].mxu0 %v665
      %v922 = vpop.f32.mrb[0].mxu0
      %v923 = vadd.f32 0.0, %v922
      %v924 = vpop.f32.mrb[0].mxu0
      %v925 = vadd.f32 0.0, %v924
      %v926 = vpop.f32.mrb[0].mxu0
      %v927 = vadd.f32 0.0, %v926
      %v928 = vpop.f32.mrb[0].mxu0
      %v929 = vadd.f32 0.0, %v928
      %930 = vdwg.mxu0
      %v931 = vmul.f32 %v543, 10.0
      %v932 = vmul.f32 %v544, 10.0
      %v933 = vmul.f32 %v853, %v931
      %v934 = vmul.f32 %v855, %v932
      %v935 = vmul.f32 %v857, %v931
      %v936 = vmul.f32 %v859, %v932
      %v937 = vmul.f32 %v863, %v931
      %v938 = vmul.f32 %v865, %v932
      %v939 = vmul.f32 %v867, %v931
      %v940 = vmul.f32 %v869, %v932
      %v941 = vmul.f32 %v873, %v931
      %v942 = vmul.f32 %v875, %v932
      %v943 = vmul.f32 %v877, %v931
      %v944 = vmul.f32 %v879, %v932
      %v945 = vmul.f32 %v883, %v931
      %v946 = vmul.f32 %v885, %v932
      %v947 = vmul.f32 %v887, %v931
      %v948 = vmul.f32 %v889, %v932
      %v949 = vmul.f32 %v893, %v931
      %v950 = vmul.f32 %v895, %v932
      %v951 = vmul.f32 %v897, %v931
      %v952 = vmul.f32 %v899, %v932
      %v953 = vmul.f32 %v903, %v931
      %v954 = vmul.f32 %v905, %v932
      %v955 = vmul.f32 %v907, %v931
      %v956 = vmul.f32 %v909, %v932
      %v957 = vmul.f32 %v913, %v931
      %v958 = vmul.f32 %v915, %v932
      %v959 = vmul.f32 %v917, %v931
      %v960 = vmul.f32 %v919, %v932
      %v961 = vmul.f32 %v923, %v931
      %v962 = vmul.f32 %v925, %v932
      %v963 = vmul.f32 %v927, %v931
      %v964 = vmul.f32 %v929, %v932
      %v965 = vsub.f32 %v782, 10.0
      %v966 = vsub.f32 %v783, 10.0
      %v967 = vsub.f32 %v784, 10.0
      %v968 = vsub.f32 %v785, 10.0
      %v969 = vsub.f32 %v786, 10.0
      %v970 = vsub.f32 %v787, 10.0
      %v971 = vsub.f32 %v788, 10.0
      %v972 = vsub.f32 %v789, 10.0
      %v973 = vsub.f32 %v790, 10.0
      %v974 = vsub.f32 %v791, 10.0
      %v975 = vsub.f32 %v792, 10.0
      %v976 = vsub.f32 %v793, 10.0
      %v977 = vsub.f32 %v794, 10.0
      %v978 = vsub.f32 %v795, 10.0
      %v979 = vsub.f32 %v796, 10.0
      %v980 = vsub.f32 %v797, 10.0
      %v981 = vsub.f32 %v798, 10.0
      %v982 = vsub.f32 %v799, 10.0
      %v983 = vsub.f32 %v800, 10.0
      %v984 = vsub.f32 %v801, 10.0
      %v985 = vsub.f32 %v802, 10.0
      %v986 = vsub.f32 %v803, 10.0
      %v987 = vsub.f32 %v804, 10.0
      %v988 = vsub.f32 %v805, 10.0
      %v989 = vsub.f32 %v806, 10.0
      %v990 = vsub.f32 %v807, 10.0
      %v991 = vsub.f32 %v808, 10.0
      %v992 = vsub.f32 %v809, 10.0
      %v993 = vsub.f32 %v810, 10.0
      %v994 = vsub.f32 %v811, 10.0
      %v995 = vsub.f32 %v812, 10.0
      %v996 = vsub.f32 %v813, 10.0
      %v997 = vsub.f32 %v933, 10.0
      %v998 = vsub.f32 %v934, 10.0
      %v999 = vsub.f32 %v935, 10.0
      %v1000 = vsub.f32 %v936, 10.0
      %v1001 = vsub.f32 %v937, 10.0
      %v1002 = vsub.f32 %v938, 10.0
      %v1003 = vsub.f32 %v939, 10.0
      %v1004 = vsub.f32 %v940, 10.0
      %v1005 = vsub.f32 %v941, 10.0
      %v1006 = vsub.f32 %v942, 10.0
      %v1007 = vsub.f32 %v943, 10.0
      %v1008 = vsub.f32 %v944, 10.0
      %v1009 = vsub.f32 %v945, 10.0
      %v1010 = vsub.f32 %v946, 10.0
      %v1011 = vsub.f32 %v947, 10.0
      %v1012 = vsub.f32 %v948, 10.0
      %v1013 = vsub.f32 %v949, 10.0
      %v1014 = vsub.f32 %v950, 10.0
      %v1015 = vsub.f32 %v951, 10.0
      %v1016 = vsub.f32 %v952, 10.0
      %v1017 = vsub.f32 %v953, 10.0
      %v1018 = vsub.f32 %v954, 10.0
      %v1019 = vsub.f32 %v955, 10.0
      %v1020 = vsub.f32 %v956, 10.0
      %v1021 = vsub.f32 %v957, 10.0
      %v1022 = vsub.f32 %v958, 10.0
      %v1023 = vsub.f32 %v959, 10.0
      %v1024 = vsub.f32 %v960, 10.0
      %v1025 = vsub.f32 %v961, 10.0
      %v1026 = vsub.f32 %v962, 10.0
      %v1027 = vsub.f32 %v963, 10.0
      %v1028 = vsub.f32 %v964, 10.0
      %v1029 = vmul.f32 %v965, 1.442695
      %v1030 = vpow.pop %v1029
      %v1031 = vmul.f32 %v966, 1.442695
      %v1032 = vpow.pop %v1031
      %v1033 = vmul.f32 %v967, 1.442695
      %v1034 = vpow.pop %v1033
      %v1035 = vmul.f32 %v968, 1.442695
      %v1036 = vpow.pop %v1035
      %v1037 = vmul.f32 %v969, 1.442695
      %v1038 = vpow.pop %v1037
      %v1039 = vmul.f32 %v970, 1.442695
      %v1040 = vpow.pop %v1039
      %v1041 = vmul.f32 %v971, 1.442695
      %v1042 = vpow.pop %v1041
      %v1043 = vmul.f32 %v972, 1.442695
      %v1044 = vpow.pop %v1043
      %v1045 = vmul.f32 %v973, 1.442695
      %v1046 = vpow.pop %v1045
      %v1047 = vmul.f32 %v974, 1.442695
      %v1048 = vpow.pop %v1047
      %v1049 = vmul.f32 %v975, 1.442695
      %v1050 = vpow.pop %v1049
      %v1051 = vmul.f32 %v976, 1.442695
      %v1052 = vpow.pop %v1051
      %v1053 = vmul.f32 %v977, 1.442695
      %v1054 = vpow.pop %v1053
      %v1055 = vmul.f32 %v978, 1.442695
      %v1056 = vpow.pop %v1055
      %v1057 = vmul.f32 %v979, 1.442695
      %v1058 = vpow.pop %v1057
      %v1059 = vmul.f32 %v980, 1.442695
      %v1060 = vpow.pop %v1059
      %v1061 = vmul.f32 %v981, 1.442695
      %v1062 = vpow.pop %v1061
      %v1063 = vmul.f32 %v982, 1.442695
      %v1064 = vpow.pop %v1063
      %v1065 = vmul.f32 %v983, 1.442695
      %v1066 = vpow.pop %v1065
      %v1067 = vmul.f32 %v984, 1.442695
      %v1068 = vpow.pop %v1067
      %v1069 = vmul.f32 %v985, 1.442695
      %v1070 = vpow.pop %v1069
      %v1071 = vmul.f32 %v986, 1.442695
      %v1072 = vpow.pop %v1071
      %v1073 = vmul.f32 %v987, 1.442695
      %v1074 = vpow.pop %v1073
      %v1075 = vmul.f32 %v988, 1.442695
      %v1076 = vpow.pop %v1075
      %v1077 = vmul.f32 %v989, 1.442695
      %v1078 = vpow.pop %v1077
      %v1079 = vmul.f32 %v990, 1.442695
      %v1080 = vpow.pop %v1079
      %v1081 = vmul.f32 %v991, 1.442695
      %v1082 = vpow.pop %v1081
      %v1083 = vmul.f32 %v992, 1.442695
      %v1084 = vpow.pop %v1083
      %v1085 = vmul.f32 %v993, 1.442695
      %v1086 = vpow.pop %v1085
      %v1087 = vmul.f32 %v994, 1.442695
      %v1088 = vpow.pop %v1087
      %v1089 = vmul.f32 %v995, 1.442695
      %v1090 = vpow.pop %v1089
      %v1091 = vmul.f32 %v996, 1.442695
      %v1092 = vpow.pop %v1091
      %v1093 = vadd.f32 %v1030, %v1034
      %v1094 = vadd.f32 %v1093, %v1038
      %v1095 = vadd.f32 %v1094, %v1042
      %v1096 = vadd.f32 %v1095, %v1046
      %v1097 = vadd.f32 %v1096, %v1050
      %v1098 = vadd.f32 %v1097, %v1054
      %v1099 = vadd.f32 %v1098, %v1058
      %v1100 = vadd.f32 %v1099, %v1062
      %v1101 = vadd.f32 %v1100, %v1066
      %v1102 = vadd.f32 %v1101, %v1070
      %v1103 = vadd.f32 %v1102, %v1074
      %v1104 = vadd.f32 %v1103, %v1078
      %v1105 = vadd.f32 %v1104, %v1082
      %v1106 = vadd.f32 %v1105, %v1086
      %v1107 = vadd.f32 %v1106, %v1090
      %v1108 = vrot.slane %v1107, 4
      %v1109 = vadd.f32 %v1107, %v1108
      %v1110 = vrot.slane %v1109, 2
      %v1111 = vadd.f32 %v1109, %v1110
      %v1112 = vrot.slane %v1111, 1
      %v1113 = vadd.f32 %v1111, %v1112
      %v1114 = vadd.f32 %v1032, %v1036
      %v1115 = vadd.f32 %v1114, %v1040
      %v1116 = vadd.f32 %v1115, %v1044
      %v1117 = vadd.f32 %v1116, %v1048
      %v1118 = vadd.f32 %v1117, %v1052
      %v1119 = vadd.f32 %v1118, %v1056
      %v1120 = vadd.f32 %v1119, %v1060
      %v1121 = vadd.f32 %v1120, %v1064
      %v1122 = vadd.f32 %v1121, %v1068
      %v1123 = vadd.f32 %v1122, %v1072
      %v1124 = vadd.f32 %v1123, %v1076
      %v1125 = vadd.f32 %v1124, %v1080
      %v1126 = vadd.f32 %v1125, %v1084
      %v1127 = vadd.f32 %v1126, %v1088
      %v1128 = vadd.f32 %v1127, %v1092
      %v1129 = vrot.slane %v1128, 4
      %v1130 = vadd.f32 %v1128, %v1129
      %v1131 = vrot.slane %v1130, 2
      %v1132 = vadd.f32 %v1130, %v1131
      %v1133 = vrot.slane %v1132, 1
      %v1134 = vadd.f32 %v1132, %v1133
      %v1135 = vlog2.pop %v1113
      %v1136 = vmul.f32 %v1135, 0.6931472
      %v1137 = vlog2.pop %v1134
      %v1138 = vmul.f32 %v1137, 0.6931472
      %v1139 = vsub.f32 %v965, %v1136
      %v1140 = vsub.f32 %v966, %v1138
      %v1141 = vsub.f32 %v967, %v1136
      %v1142 = vsub.f32 %v968, %v1138
      %v1143 = vsub.f32 %v969, %v1136
      %v1144 = vsub.f32 %v970, %v1138
      %v1145 = vsub.f32 %v971, %v1136
      %v1146 = vsub.f32 %v972, %v1138
      %v1147 = vsub.f32 %v973, %v1136
      %v1148 = vsub.f32 %v974, %v1138
      %v1149 = vsub.f32 %v975, %v1136
      %v1150 = vsub.f32 %v976, %v1138
      %v1151 = vsub.f32 %v977, %v1136
      %v1152 = vsub.f32 %v978, %v1138
      %v1153 = vsub.f32 %v979, %v1136
      %v1154 = vsub.f32 %v980, %v1138
      %v1155 = vsub.f32 %v981, %v1136
      %v1156 = vsub.f32 %v982, %v1138
      %v1157 = vsub.f32 %v983, %v1136
      %v1158 = vsub.f32 %v984, %v1138
      %v1159 = vsub.f32 %v985, %v1136
      %v1160 = vsub.f32 %v986, %v1138
      %v1161 = vsub.f32 %v987, %v1136
      %v1162 = vsub.f32 %v988, %v1138
      %v1163 = vsub.f32 %v989, %v1136
      %v1164 = vsub.f32 %v990, %v1138
      %v1165 = vsub.f32 %v991, %v1136
      %v1166 = vsub.f32 %v992, %v1138
      %v1167 = vsub.f32 %v993, %v1136
      %v1168 = vsub.f32 %v994, %v1138
      %v1169 = vsub.f32 %v995, %v1136
      %v1170 = vsub.f32 %v996, %v1138
      %v1171 = vrcp.pop %v1113
      %v1172 = vrcp.pop %v1134
      %v1173 = vmul.f32 %v1030, %v1171
      %v1174 = vmul.f32 %v1032, %v1172
      %v1175 = vmul.f32 %v1034, %v1171
      %v1176 = vmul.f32 %v1036, %v1172
      %v1177 = vmul.f32 %v1038, %v1171
      %v1178 = vmul.f32 %v1040, %v1172
      %v1179 = vmul.f32 %v1042, %v1171
      %v1180 = vmul.f32 %v1044, %v1172
      %v1181 = vmul.f32 %v1046, %v1171
      %v1182 = vmul.f32 %v1048, %v1172
      %v1183 = vmul.f32 %v1050, %v1171
      %v1184 = vmul.f32 %v1052, %v1172
      %v1185 = vmul.f32 %v1054, %v1171
      %v1186 = vmul.f32 %v1056, %v1172
      %v1187 = vmul.f32 %v1058, %v1171
      %v1188 = vmul.f32 %v1060, %v1172
      %v1189 = vmul.f32 %v1062, %v1171
      %v1190 = vmul.f32 %v1064, %v1172
      %v1191 = vmul.f32 %v1066, %v1171
      %v1192 = vmul.f32 %v1068, %v1172
      %v1193 = vmul.f32 %v1070, %v1171
      %v1194 = vmul.f32 %v1072, %v1172
      %v1195 = vmul.f32 %v1074, %v1171
      %v1196 = vmul.f32 %v1076, %v1172
      %v1197 = vmul.f32 %v1078, %v1171
      %v1198 = vmul.f32 %v1080, %v1172
      %v1199 = vmul.f32 %v1082, %v1171
      %v1200 = vmul.f32 %v1084, %v1172
      %v1201 = vmul.f32 %v1086, %v1171
      %v1202 = vmul.f32 %v1088, %v1172
      %v1203 = vmul.f32 %v1090, %v1171
      %v1204 = vmul.f32 %v1092, %v1172
      %v1205 = vmul.f32 %v997, 1.442695
      %v1206 = vpow.pop %v1205
      %v1207 = vmul.f32 %v998, 1.442695
      %v1208 = vpow.pop %v1207
      %v1209 = vmul.f32 %v999, 1.442695
      %v1210 = vpow.pop %v1209
      %v1211 = vmul.f32 %v1000, 1.442695
      %v1212 = vpow.pop %v1211
      %v1213 = vmul.f32 %v1001, 1.442695
      %v1214 = vpow.pop %v1213
      %v1215 = vmul.f32 %v1002, 1.442695
      %v1216 = vpow.pop %v1215
      %v1217 = vmul.f32 %v1003, 1.442695
      %v1218 = vpow.pop %v1217
      %v1219 = vmul.f32 %v1004, 1.442695
      %v1220 = vpow.pop %v1219
      %v1221 = vmul.f32 %v1005, 1.442695
      %v1222 = vpow.pop %v1221
      %v1223 = vmul.f32 %v1006, 1.442695
      %v1224 = vpow.pop %v1223
      %v1225 = vmul.f32 %v1007, 1.442695
      %v1226 = vpow.pop %v1225
      %v1227 = vmul.f32 %v1008, 1.442695
      %v1228 = vpow.pop %v1227
      %v1229 = vmul.f32 %v1009, 1.442695
      %v1230 = vpow.pop %v1229
      %v1231 = vmul.f32 %v1010, 1.442695
      %v1232 = vpow.pop %v1231
      %v1233 = vmul.f32 %v1011, 1.442695
      %v1234 = vpow.pop %v1233
      %v1235 = vmul.f32 %v1012, 1.442695
      %v1236 = vpow.pop %v1235
      %v1237 = vmul.f32 %v1013, 1.442695
      %v1238 = vpow.pop %v1237
      %v1239 = vmul.f32 %v1014, 1.442695
      %v1240 = vpow.pop %v1239
      %v1241 = vmul.f32 %v1015, 1.442695
      %v1242 = vpow.pop %v1241
      %v1243 = vmul.f32 %v1016, 1.442695
      %v1244 = vpow.pop %v1243
      %v1245 = vmul.f32 %v1017, 1.442695
      %v1246 = vpow.pop %v1245
      %v1247 = vmul.f32 %v1018, 1.442695
      %v1248 = vpow.pop %v1247
      %v1249 = vmul.f32 %v1019, 1.442695
      %v1250 = vpow.pop %v1249
      %v1251 = vmul.f32 %v1020, 1.442695
      %v1252 = vpow.pop %v1251
      %v1253 = vmul.f32 %v1021, 1.442695
      %v1254 = vpow.pop %v1253
      %v1255 = vmul.f32 %v1022, 1.442695
      %v1256 = vpow.pop %v1255
      %v1257 = vmul.f32 %v1023, 1.442695
      %v1258 = vpow.pop %v1257
      %v1259 = vmul.f32 %v1024, 1.442695
      %v1260 = vpow.pop %v1259
      %v1261 = vmul.f32 %v1025, 1.442695
      %v1262 = vpow.pop %v1261
      %v1263 = vmul.f32 %v1026, 1.442695
      %v1264 = vpow.pop %v1263
      %v1265 = vmul.f32 %v1027, 1.442695
      %v1266 = vpow.pop %v1265
      %v1267 = vmul.f32 %v1028, 1.442695
      %v1268 = vpow.pop %v1267
      %v1269 = vadd.f32 %v1206, %v1210
      %v1270 = vadd.f32 %v1269, %v1214
      %v1271 = vadd.f32 %v1270, %v1218
      %v1272 = vadd.f32 %v1271, %v1222
      %v1273 = vadd.f32 %v1272, %v1226
      %v1274 = vadd.f32 %v1273, %v1230
      %v1275 = vadd.f32 %v1274, %v1234
      %v1276 = vadd.f32 %v1275, %v1238
      %v1277 = vadd.f32 %v1276, %v1242
      %v1278 = vadd.f32 %v1277, %v1246
      %v1279 = vadd.f32 %v1278, %v1250
      %v1280 = vadd.f32 %v1279, %v1254
      %v1281 = vadd.f32 %v1280, %v1258
      %v1282 = vadd.f32 %v1281, %v1262
      %v1283 = vadd.f32 %v1282, %v1266
      %v1284 = vrot.slane %v1283, 4
      %v1285 = vadd.f32 %v1283, %v1284
      %v1286 = vrot.slane %v1285, 2
      %v1287 = vadd.f32 %v1285, %v1286
      %v1288 = vrot.slane %v1287, 1
      %v1289 = vadd.f32 %v1287, %v1288
      %v1290 = vadd.f32 %v1208, %v1212
      %v1291 = vadd.f32 %v1290, %v1216
      %v1292 = vadd.f32 %v1291, %v1220
      %v1293 = vadd.f32 %v1292, %v1224
      %v1294 = vadd.f32 %v1293, %v1228
      %v1295 = vadd.f32 %v1294, %v1232
      %v1296 = vadd.f32 %v1295, %v1236
      %v1297 = vadd.f32 %v1296, %v1240
      %v1298 = vadd.f32 %v1297, %v1244
      %v1299 = vadd.f32 %v1298, %v1248
      %v1300 = vadd.f32 %v1299, %v1252
      %v1301 = vadd.f32 %v1300, %v1256
      %v1302 = vadd.f32 %v1301, %v1260
      %v1303 = vadd.f32 %v1302, %v1264
      %v1304 = vadd.f32 %v1303, %v1268
      %v1305 = vrot.slane %v1304, 4
      %v1306 = vadd.f32 %v1304, %v1305
      %v1307 = vrot.slane %v1306, 2
      %v1308 = vadd.f32 %v1306, %v1307
      %v1309 = vrot.slane %v1308, 1
      %v1310 = vadd.f32 %v1308, %v1309
      %v1311 = vlog2.pop %v1289
      %v1312 = vmul.f32 %v1311, 0.6931472
      %v1313 = vlog2.pop %v1310
      %v1314 = vmul.f32 %v1313, 0.6931472
      %v1315 = vsub.f32 %v997, %v1312
      %v1316 = vsub.f32 %v998, %v1314
      %v1317 = vsub.f32 %v999, %v1312
      %v1318 = vsub.f32 %v1000, %v1314
      %v1319 = vsub.f32 %v1001, %v1312
      %v1320 = vsub.f32 %v1002, %v1314
      %v1321 = vsub.f32 %v1003, %v1312
      %v1322 = vsub.f32 %v1004, %v1314
      %v1323 = vsub.f32 %v1005, %v1312
      %v1324 = vsub.f32 %v1006, %v1314
      %v1325 = vsub.f32 %v1007, %v1312
      %v1326 = vsub.f32 %v1008, %v1314
      %v1327 = vsub.f32 %v1009, %v1312
      %v1328 = vsub.f32 %v1010, %v1314
      %v1329 = vsub.f32 %v1011, %v1312
      %v1330 = vsub.f32 %v1012, %v1314
      %v1331 = vsub.f32 %v1013, %v1312
      %v1332 = vsub.f32 %v1014, %v1314
      %v1333 = vsub.f32 %v1015, %v1312
      %v1334 = vsub.f32 %v1016, %v1314
      %v1335 = vsub.f32 %v1017, %v1312
      %v1336 = vsub.f32 %v1018, %v1314
      %v1337 = vsub.f32 %v1019, %v1312
      %v1338 = vsub.f32 %v1020, %v1314
      %v1339 = vsub.f32 %v1021, %v1312
      %v1340 = vsub.f32 %v1022, %v1314
      %v1341 = vsub.f32 %v1023, %v1312
      %v1342 = vsub.f32 %v1024, %v1314
      %v1343 = vsub.f32 %v1025, %v1312
      %v1344 = vsub.f32 %v1026, %v1314
      %v1345 = vsub.f32 %v1027, %v1312
      %v1346 = vsub.f32 %v1028, %v1314
      %v1347 = vsub.f32 %v1139, %v1315
      %v1348 = vsub.f32 %v1140, %v1316
      %v1349 = vsub.f32 %v1141, %v1317
      %v1350 = vsub.f32 %v1142, %v1318
      %v1351 = vsub.f32 %v1143, %v1319
      %v1352 = vsub.f32 %v1144, %v1320
      %v1353 = vsub.f32 %v1145, %v1321
      %v1354 = vsub.f32 %v1146, %v1322
      %v1355 = vsub.f32 %v1147, %v1323
      %v1356 = vsub.f32 %v1148, %v1324
      %v1357 = vsub.f32 %v1149, %v1325
      %v1358 = vsub.f32 %v1150, %v1326
      %v1359 = vsub.f32 %v1151, %v1327
      %v1360 = vsub.f32 %v1152, %v1328
      %v1361 = vsub.f32 %v1153, %v1329
      %v1362 = vsub.f32 %v1154, %v1330
      %v1363 = vsub.f32 %v1155, %v1331
      %v1364 = vsub.f32 %v1156, %v1332
      %v1365 = vsub.f32 %v1157, %v1333
      %v1366 = vsub.f32 %v1158, %v1334
      %v1367 = vsub.f32 %v1159, %v1335
      %v1368 = vsub.f32 %v1160, %v1336
      %v1369 = vsub.f32 %v1161, %v1337
      %v1370 = vsub.f32 %v1162, %v1338
      %v1371 = vsub.f32 %v1163, %v1339
      %v1372 = vsub.f32 %v1164, %v1340
      %v1373 = vsub.f32 %v1165, %v1341
      %v1374 = vsub.f32 %v1166, %v1342
      %v1375 = vsub.f32 %v1167, %v1343
      %v1376 = vsub.f32 %v1168, %v1344
      %v1377 = vsub.f32 %v1169, %v1345
      %v1378 = vsub.f32 %v1170, %v1346
      %v1379 = vmul.f32 %v1173, %v1347
      %v1380 = vmul.f32 %v1174, %v1348
      %v1381 = vmul.f32 %v1175, %v1349
      %v1382 = vmul.f32 %v1176, %v1350
      %v1383 = vmul.f32 %v1177, %v1351
      %v1384 = vmul.f32 %v1178, %v1352
      %v1385 = vmul.f32 %v1179, %v1353
      %v1386 = vmul.f32 %v1180, %v1354
      %v1387 = vmul.f32 %v1181, %v1355
      %v1388 = vmul.f32 %v1182, %v1356
      %v1389 = vmul.f32 %v1183, %v1357
      %v1390 = vmul.f32 %v1184, %v1358
      %v1391 = vmul.f32 %v1185, %v1359
      %v1392 = vmul.f32 %v1186, %v1360
      %v1393 = vmul.f32 %v1187, %v1361
      %v1394 = vmul.f32 %v1188, %v1362
      %v1395 = vmul.f32 %v1189, %v1363
      %v1396 = vmul.f32 %v1190, %v1364
      %v1397 = vmul.f32 %v1191, %v1365
      %v1398 = vmul.f32 %v1192, %v1366
      %v1399 = vmul.f32 %v1193, %v1367
      %v1400 = vmul.f32 %v1194, %v1368
      %v1401 = vmul.f32 %v1195, %v1369
      %v1402 = vmul.f32 %v1196, %v1370
      %v1403 = vmul.f32 %v1197, %v1371
      %v1404 = vmul.f32 %v1198, %v1372
      %v1405 = vmul.f32 %v1199, %v1373
      %v1406 = vmul.f32 %v1200, %v1374
      %v1407 = vmul.f32 %v1201, %v1375
      %v1408 = vmul.f32 %v1202, %v1376
      %v1409 = vmul.f32 %v1203, %v1377
      %v1410 = vmul.f32 %v1204, %v1378
      %v1411 = vadd.f32 %v1379, %v1381
      %v1412 = vadd.f32 %v1411, %v1383
      %v1413 = vadd.f32 %v1412, %v1385
      %v1414 = vadd.f32 %v1413, %v1387
      %v1415 = vadd.f32 %v1414, %v1389
      %v1416 = vadd.f32 %v1415, %v1391
      %v1417 = vadd.f32 %v1416, %v1393
      %v1418 = vadd.f32 %v1417, %v1395
      %v1419 = vadd.f32 %v1418, %v1397
      %v1420 = vadd.f32 %v1419, %v1399
      %v1421 = vadd.f32 %v1420, %v1401
      %v1422 = vadd.f32 %v1421, %v1403
      %v1423 = vadd.f32 %v1422, %v1405
      %v1424 = vadd.f32 %v1423, %v1407
      %v1425 = vadd.f32 %v1424, %v1409
      %v1426 = vrot.slane %v1425, 4
      %v1427 = vadd.f32 %v1425, %v1426
      %v1428 = vrot.slane %v1427, 2
      %v1429 = vadd.f32 %v1427, %v1428
      %v1430 = vrot.slane %v1429, 1
      %v1431 = vadd.f32 %v1429, %v1430
      %v1432 = vadd.f32 %v1380, %v1382
      %v1433 = vadd.f32 %v1432, %v1384
      %v1434 = vadd.f32 %v1433, %v1386
      %v1435 = vadd.f32 %v1434, %v1388
      %v1436 = vadd.f32 %v1435, %v1390
      %v1437 = vadd.f32 %v1436, %v1392
      %v1438 = vadd.f32 %v1437, %v1394
      %v1439 = vadd.f32 %v1438, %v1396
      %v1440 = vadd.f32 %v1439, %v1398
      %v1441 = vadd.f32 %v1440, %v1400
      %v1442 = vadd.f32 %v1441, %v1402
      %v1443 = vadd.f32 %v1442, %v1404
      %v1444 = vadd.f32 %v1443, %v1406
      %v1445 = vadd.f32 %v1444, %v1408
      %v1446 = vadd.f32 %v1445, %v1410
      %v1447 = vrot.slane %v1446, 4
      %v1448 = vadd.f32 %v1446, %v1447
      %v1449 = vrot.slane %v1448, 2
      %v1450 = vadd.f32 %v1448, %v1449
      %v1451 = vrot.slane %v1450, 1
      %v1452 = vadd.f32 %v1450, %v1451
      %v1455 = vcombine.low %v1431, %v1452
      %v1457 = vunpack.c.l.s4 1966171168
      %v1458 = vunpack.c.0.s8 %v1457
      %v1459 = vlaneseq
      %v1460 = vshrl.u32 %v1459, 7
      %v1461 = vsub.s32 %v1458, %v1460
      %v1462 = vrot.slane %v1455, %v1461
      %v1464 = vunpack.c.l.s4 1966171168
      %v1465 = vunpack.c.0.s8 %v1464
      %v1466 = vlaneseq
      %v1467 = vshrl.u32 %v1466, 7
      %v1468 = vsub.s32 %v1465, %v1467
      %v1469 = vrot.slane %v1462, %v1468
      %v1471 = vlaneseq
      %vm1472 = vcmp.ge.s32.totalorder %v1471, 0
      %vm1473 = vcmp.lt.s32.totalorder %v1471, 256
      %vm1474 = vmand %vm1472, %vm1473
      %1475 = vst.msk [vmem:[%s323] sm:$0x3] %vm1474, %v1469
      %p1476 = scmp.lt.s32.totalorder %s21, 1
      %s1477 = scalar_select %p1476, %s21, 1
      %p1478 = scmp.lt.s32.totalorder %s22, 0
      %s1479 = scalar_select %p1478, %s22, 0
      %s1480 = smul.addr %s1479, 2
      %s1481 = smul.addr %s1477, 2
      %s1482 = sadd.s32 %s1480, %s1481
      %s1483 = scalar_lea.vmem %s6, %s1482
      // Predicated region
      $region45: #{memory_p2p_loss_forward.3} parent=43 // pred_check
        %p1484 = pneg %p189
      $region46: #{memory_p2p_loss_forward.3} parent=43 // pred_check_branch
        %1486 = sbr.rel (%p1484) target = $region48
      $region47: #{memory_p2p_loss_forward.3} parent=43 // pred_region
        _
      $region48: #{memory_p2p_loss_forward.3} parent=43 // pred_fallthru
        _
    $region44: #{memory_p2p_loss_forward.3} parent=5 // pred_fallthru
      _
    %p1487 = scmp.le.s32.totalorder 2, %s12
    // Predicated region
    $region49: #{memory_p2p_loss_forward.3} parent=5 // pred_check
      %p1488 = pneg %p1487
    $region50: #{memory_p2p_loss_forward.3} parent=5 // pred_check_branch
      %1490 = sbr.rel (%p1488) target = $region52
    $region51: #{memory_p2p_loss_forward.3} parent=5 // pred_region
      %s1491 = ssub.s32 %s12, 2
      // Predicated region
      $region53: #{memory_p2p_loss_forward.3} parent=51 // pred_check
        %p1492 = pneg %p195
      $region54: #{memory_p2p_loss_forward.3} parent=51 // pred_check_branch
        %1494 = sbr.rel (%p1492) target = $region56
      $region55: #{memory_p2p_loss_forward.3} parent=51 // pred_region
        %p1495 = scmp.lt.s32.totalorder %s23, 1
        %s1496 = scalar_select %p1495, %s23, 1
        %p1497 = scmp.lt.s32.totalorder %s24, 0
        %s1498 = scalar_select %p1497, %s24, 0
        %s1499 = smul.addr %s1498, 2
        %s1500 = smul.addr %s1496, 2
        %s1501 = sadd.s32 %s1499, %s1500
        %s1502 = scalar_lea.vmem %s6, %s1501
      $region56: #{memory_p2p_loss_forward.3} parent=51 // pred_fallthru
        _
    $region52: #{memory_p2p_loss_forward.3} parent=5 // pred_fallthru
      _
  $region6: #{memory_p2p_loss_forward.3} parent=0 // loop_footer
    %s16 = sadd.s32 1, %s12
  $region7: #{memory_p2p_loss_forward.3} parent=0 // loop_footer_branch
    %11 = sbr.rel target = $region3
  $region8: #{memory_p2p_loss_forward.3} parent=0 // loop_exit
    _

</llo_original>
